<compile_context>
chip_gen: v5e
topology: v5e:2x2
jax: 0.10.0
libtpu: 0.0.40
codegen_flags: <defaults>
</compile_context>

<pallas_src>
import jax
import jax.numpy as jnp
from jax.experimental import pallas as pl
from jax.experimental.pallas import tpu as pltpu  # noqa: F401  (VMEM defaults)

# ------------------------------ configuration ------------------------------ #
IMG = 16
PATCH = 8
CHANNELS = 3
HIDDEN = 32
NUM_HEADS = 4
HEAD_DIM = HIDDEN // NUM_HEADS             # 8
MLP_DIM = 64
NUM_LAYERS = 2
NUM_CLASSES = 7
NUM_PATCHES = (IMG // PATCH) ** 2          # 4
SEQ = NUM_PATCHES + 1                      # 5 ([CLS] + patches)
SEQ_PAD = 8                                # padded to a full 8-sublane tile
PATCH_DIM = CHANNELS * PATCH * PATCH       # 192
HEAD_OUT_PAD = 128                         # lane-dense packed head output
LN_EPS = 1e-12                             # HF ViT default layer_norm_eps
NEG_INF = -1e30

# ------------------------- packed-slab row offsets -------------------------- #
# w32 slab (rows, 32): patch_w | per layer [wq | wk | wv | wo | w2]
W32_PATCH = 0
W32_LAYER = PATCH_DIM
W32_LAYER_ROWS = 4 * HIDDEN + MLP_DIM                      # 192
W32_ROWS = PATCH_DIM + NUM_LAYERS * W32_LAYER_ROWS         # 576

# w64 slab (rows, 64): w1 per layer | b1 per layer
W64_B1 = NUM_LAYERS * HIDDEN                                # 64
W64_ROWS = W64_B1 + NUM_LAYERS                              # 66

# v32 slab (rows, 32): add_rows(SEQ_PAD) | per layer 9 vectors | final LN (2)
V32_ADD = 0
V32_LAYER = SEQ_PAD
V32_LAYER_ROWS = 9
V32_FINAL = SEQ_PAD + NUM_LAYERS * V32_LAYER_ROWS           # 26
V32_ROWS = V32_FINAL + 2                                    # 28

# w128 slab (rows, 128): head_w | head_b
W128_ROWS = HIDDEN + 1                                      # 33


# -------------------------------- helpers ----------------------------------- #
def _layernorm(x, w, b):
    """LayerNorm over the last axis; w/b are (1, dim) and broadcast."""
    mu = jnp.mean(x, axis=-1, keepdims=True)
    var = jnp.mean(jnp.square(x - mu), axis=-1, keepdims=True)
    return (x - mu) * jax.lax.rsqrt(var + LN_EPS) * w + b


# ------------------------------ fused kernel -------------------------------- #
def _vit_fused_kernel(patches_ref, w32_ref, w64_ref, v32_ref, w128_ref, out_ref):
    f32 = jnp.float32
    B = out_ref.shape[0]
    M = B * SEQ_PAD

    # ---- patch embedding as ONE 2D matmul over all token rows ----
    # patches_ref rows per batch: [cls slot (zeros), 4 patch rows, 3 pad zeros]
    emb = jnp.dot(patches_ref[...],
                  w32_ref[W32_PATCH:W32_PATCH + PATCH_DIM, :],
                  preferred_element_type=f32)                    # (M, 32)
    # add_rows: row0 = cls_token + pos[0]; rows1..4 = patch_b + pos[1..4]; pad 0
    add_rows = v32_ref[V32_ADD:V32_ADD + SEQ_PAD, :]             # (8, 32)
    x = emb + jnp.concatenate([add_rows] * B, axis=0)            # (M, 32)

    # additive mask for the padded key positions (hoisted out of the loop)
    key_mask = jnp.where(
        jax.lax.broadcasted_iota(jnp.int32, (1, SEQ_PAD), 1) < SEQ,
        0.0, NEG_INF).astype(f32)                                # (1, 8)

    for l in range(NUM_LAYERS):                                  # static unroll
        wl = W32_LAYER + l * W32_LAYER_ROWS
        vl = V32_LAYER + l * V32_LAYER_ROWS
        ln1_w = v32_ref[vl + 0:vl + 1, :]
        ln1_b = v32_ref[vl + 1:vl + 2, :]
        bq = v32_ref[vl + 2:vl + 3, :]
        bk = v32_ref[vl + 3:vl + 4, :]
        bv = v32_ref[vl + 4:vl + 5, :]
        bo = v32_ref[vl + 5:vl + 6, :]
        ln2_w = v32_ref[vl + 6:vl + 7, :]
        ln2_b = v32_ref[vl + 7:vl + 8, :]
        b2 = v32_ref[vl + 8:vl + 9, :]

        # --- multi-head self-attention (pre-norm) ---
        xn = _layernorm(x, ln1_w, ln1_b)                         # (M, 32)
        # single 2D matmuls; 1/sqrt(HEAD_DIM) already folded into Wq at init
        q = jnp.dot(xn, w32_ref[wl + 0 * HIDDEN:wl + 1 * HIDDEN, :],
                    preferred_element_type=f32) + bq
        k = jnp.dot(xn, w32_ref[wl + 1 * HIDDEN:wl + 2 * HIDDEN, :],
                    preferred_element_type=f32) + bk
        v = jnp.dot(xn, w32_ref[wl + 2 * HIDDEN:wl + 3 * HIDDEN, :],
                    preferred_element_type=f32) + bv

        # layout-trivial splits: SEQ_PAD == 8 == one full sublane tile
        q3 = q.reshape(B, SEQ_PAD, HIDDEN)
        k3 = k.reshape(B, SEQ_PAD, HIDDEN)
        v3 = v.reshape(B, SEQ_PAD, HIDDEN)

        ctx_heads = []
        for h in range(NUM_HEADS):                               # static unroll
            lo, hi = h * HEAD_DIM, (h + 1) * HEAD_DIM
            qh = q3[:, :, lo:hi]                                 # (B, 8, 8)
            kh = k3[:, :, lo:hi]
            vh = v3[:, :, lo:hi]
            s = jnp.einsum("bqd,bkd->bqk", qh, kh,
                           preferred_element_type=f32) + key_mask
            s = s - jnp.max(s, axis=-1, keepdims=True)
            p = jnp.exp(s)
            p = p * pl.reciprocal(jnp.sum(p, axis=-1, keepdims=True), approx=True)
            ctx_heads.append(jnp.einsum("bqk,bkd->bqd", p, vh,
                                        preferred_element_type=f32))
        # head concat on lanes + ONE output-projection matmul
        ctx = jnp.concatenate(ctx_heads, axis=-1).reshape(M, HIDDEN)
        attn = jnp.dot(ctx, w32_ref[wl + 3 * HIDDEN:wl + 4 * HIDDEN, :],
                       preferred_element_type=f32) + bo
        x = x + attn                                             # residual

        # --- MLP (pre-norm), single 2D matmuls ---
        xn2 = _layernorm(x, ln2_w, ln2_b)
        w1 = w64_ref[l * HIDDEN:(l + 1) * HIDDEN, :]             # (32, 64)
        b1 = w64_ref[W64_B1 + l:W64_B1 + l + 1, :]               # (1, 64)
        h1 = jnp.dot(xn2, w1, preferred_element_type=f32) + b1
        # TODO(synk): HF ViT uses exact (erf) GELU; tanh-approximate GELU kept
        # for portable Mosaic lowering.
        h1 = jax.nn.gelu(h1)
        h2 = jnp.dot(h1, w32_ref[wl + 4 * HIDDEN:wl + 4 * HIDDEN + MLP_DIM, :],
                     preferred_element_type=f32) + b2
        x = x + h2                                               # residual

    # ---- final LayerNorm + packed classifier/regressor heads on [CLS] ----
    cls_rows = jnp.concatenate(
        [x[b * SEQ_PAD:b * SEQ_PAD + 1, :] for b in range(B)], axis=0)  # (B, 32)
    fln_w = v32_ref[V32_FINAL:V32_FINAL + 1, :]
    fln_b = v32_ref[V32_FINAL + 1:V32_FINAL + 2, :]
    cls_n = _layernorm(cls_rows, fln_w, fln_b)
    out_ref[...] = (jnp.dot(cls_n, w128_ref[0:HIDDEN, :],
                            preferred_element_type=f32)
                    + w128_ref[HIDDEN:HIDDEN + 1, :])


# ------------------------------- JAX glue ------------------------------------ #
def extract_patches(images):
    """NCHW images -> (B, num_patches, C*p*p); matches Conv2d(k=p, stride=p)
    followed by flatten(2).transpose(1, 2) in HF ViT."""
    B, C, H, W = images.shape
    ph, pw = H // PATCH, W // PATCH
    x = images.reshape(B, C, ph, PATCH, pw, PATCH)
    x = x.transpose(0, 2, 4, 1, 3, 5)                  # (B, ph, pw, C, p, p)
    return x.reshape(B, ph * pw, C * PATCH * PATCH)


@jax.jit
def vit_object_detection(images, params):
    B = images.shape[0]
    patches = extract_patches(images)                  # (B, P, PATCH_DIM)
    # Zero row for the [CLS] slot + zero rows padding the sequence to SEQ_PAD,
    # so the patch projection covers every token row in one 2D matmul.
    patches_aug = jnp.concatenate(
        [jnp.zeros((B, 1, PATCH_DIM), patches.dtype),
         patches,
         jnp.zeros((B, SEQ_PAD - SEQ, PATCH_DIM), patches.dtype)],
        axis=1).reshape(B * SEQ_PAD, PATCH_DIM)        # (B*SEQ_PAD, 192)

    packed = pl.pallas_call(
        _vit_fused_kernel,
        out_shape=jax.ShapeDtypeStruct((B, HEAD_OUT_PAD), jnp.float32),
    )(patches_aug, params["w32"], params["w64"], params["v32"], params["w128"])

    class_logits = packed[:, :NUM_CLASSES]
    bbox_coords = packed[:, NUM_CLASSES:NUM_CLASSES + 4]
    return class_logits, bbox_coords


# ------------------------------ parameter init -------------------------------- #
def init_params(key):
    # TODO(synk): pretrained google/vit-base weights cannot be loaded here;
    # deterministic synthetic initialization of the same parameter structure.
    def normal(k, shape):
        return 0.02 * jax.random.normal(k, shape, jnp.float32)

    keys = jax.random.split(key, 5 + NUM_LAYERS)
    patch_w = normal(keys[0], (PATCH_DIM, HIDDEN))
    patch_b = jnp.zeros((HIDDEN,), jnp.float32)
    cls_token = normal(keys[1], (HIDDEN,))
    pos_emb = normal(keys[2], (SEQ, HIDDEN))
    cls_head_w = normal(keys[3], (HIDDEN, NUM_CLASSES))
    reg_head_w = normal(keys[4], (HIDDEN, 4))

    scale = 1.0 / (HEAD_DIM ** 0.5)

    # --- v32 slab: additive rows + per-layer vectors + final LN ---
    add_rows = jnp.zeros((SEQ_PAD, HIDDEN), jnp.float32)
    add_rows = add_rows.at[0].set(cls_token + pos_emb[0])
    add_rows = add_rows.at[1:SEQ].set(patch_b[None, :] + pos_emb[1:])
    v32_rows = [add_rows]

    w32_rows = [patch_w]
    w64_w1_rows, w64_b1_rows = [], []

    ones = jnp.ones((1, HIDDEN), jnp.float32)
    zeros = jnp.zeros((1, HIDDEN), jnp.float32)

    for l in range(NUM_LAYERS):
        lk = jax.random.split(keys[5 + l], 6)
        wq = normal(lk[0], (HIDDEN, HIDDEN)) * scale   # softmax scale folded in
        wk = normal(lk[1], (HIDDEN, HIDDEN))
        wv = normal(lk[2], (HIDDEN, HIDDEN))
        wo = normal(lk[3], (HIDDEN, HIDDEN))
        w1 = normal(lk[4], (HIDDEN, MLP_DIM))
        w2 = normal(lk[5], (MLP_DIM, HIDDEN))
        w32_rows += [wq, wk, wv, wo, w2]
        w64_w1_rows.append(w1)
        w64_b1_rows.append(jnp.zeros((1, MLP_DIM), jnp.float32))
        # ln1_w, ln1_b, bq (scale-folded; zero), bk, bv, bo, ln2_w, ln2_b, b2
        v32_rows += [ones, zeros, zeros, zeros, zeros, zeros, ones, zeros, zeros]

    v32_rows += [ones, zeros]                          # final_ln_w, final_ln_b

    # --- packed lane-dense head: cols [0:7] classifier, [7:11] regressor ---
    head_w = jnp.zeros((HIDDEN, HEAD_OUT_PAD), jnp.float32)
    head_w = head_w.at[:, :NUM_CLASSES].set(cls_head_w)
    head_w = head_w.at[:, NUM_CLASSES:NUM_CLASSES + 4].set(reg_head_w)
    head_b = jnp.zeros((1, HEAD_OUT_PAD), jnp.float32)

    params = {
        "w32": jnp.concatenate(w32_rows, axis=0),                   # (576, 32)
        "w64": jnp.concatenate(w64_w1_rows + w64_b1_rows, axis=0),  # (66, 64)
        "v32": jnp.concatenate(v32_rows, axis=0),                   # (28, 32)
        "w128": jnp.concatenate([head_w, head_b], axis=0),          # (33, 128)
    }
    assert params["w32"].shape == (W32_ROWS, HIDDEN)
    assert params["w64"].shape == (W64_ROWS, MLP_DIM)
    assert params["v32"].shape == (V32_ROWS, HIDDEN)
    assert params["w128"].shape == (W128_ROWS, HEAD_OUT_PAD)
    return params


# ----------------------------------- main ------------------------------------ #
if __name__ == "__main__":
    key = jax.random.PRNGKey(0)
    kp, ki = jax.random.split(key)
    params = init_params(kp)
    images = jax.random.normal(ki, (2, CHANNELS, IMG, IMG), jnp.float32)

    class_logits, bbox_coords = vit_object_detection(images, params)
    jax.block_until_ready((class_logits, bbox_coords))

    assert class_logits.shape == (2, NUM_CLASSES)
    assert bbox_coords.shape == (2, 4)
    assert class_logits.dtype == jnp.float32 and bbox_coords.dtype == jnp.float32
    assert bool(jnp.all(jnp.isfinite(class_logits)))
    assert bool(jnp.all(jnp.isfinite(bbox_coords)))
    print("KERNEL_OK")
</pallas_src>

<mosaic_0001>
module attributes {stable_mosaic.version = 11 : i64} {
  func.func @_vit_fused_kernel(%arg0: memref<16x192xf32, #tpu.memory_space<vmem>>, %arg1: memref<576x32xf32, #tpu.memory_space<vmem>>, %arg2: memref<66x64xf32, #tpu.memory_space<vmem>>, %arg3: memref<28x32xf32, #tpu.memory_space<vmem>>, %arg4: memref<33x128xf32, #tpu.memory_space<vmem>>, %arg5: memref<2x128xf32, #tpu.memory_space<vmem>>) attributes {dimension_semantics = [], scalar_prefetch = 0 : i64, scratch_operands = 0 : i64, tpu.core_type = #tpu.core_type<tc>} {
    %c0 = arith.constant 0 : index
    %c0_0 = arith.constant 0 : index
    %0 = vector.load %arg0[%c0, %c0_0] : memref<16x192xf32, #tpu.memory_space<vmem>>, vector<16x192xf32>
    %c0_1 = arith.constant 0 : index
    %c0_2 = arith.constant 0 : index
    %1 = vector.load %arg1[%c0_1, %c0_2] : memref<576x32xf32, #tpu.memory_space<vmem>>, vector<192x32xf32>
    %cst = arith.constant dense<0.000000e+00> : vector<16x32xf32>
    %2 = tpu.matmul %0, %1, %cst {dimension_numbers = #tpu.dot_dimension_numbers<[1], [0], [0], [1], [0, 0, 1, 1], [], []>} : vector<16x192xf32>, vector<192x32xf32>, vector<16x32xf32> -> vector<16x32xf32>
    %c0_3 = arith.constant 0 : index
    %c0_4 = arith.constant 0 : index
    %3 = vector.load %arg3[%c0_3, %c0_4] : memref<28x32xf32, #tpu.memory_space<vmem>>, vector<8x32xf32>
    %4 = tpu.concatenate %3, %3 in 0 : vector<8x32xf32>, vector<8x32xf32> -> vector<16x32xf32>
    %5 = arith.addf %2, %4 : vector<16x32xf32>
    %6 = tpu.iota {dimensions = array<i32: 1>} : vector<1x8xi32>
    %c5_i32 = arith.constant 5 : i32
    %7 = vector.broadcast %c5_i32 : i32 to vector<1x8xi32>
    %8 = arith.cmpi slt, %6, %7 : vector<1x8xi32>
    %cst_5 = arith.constant 0.000000e+00 : f32
    %cst_6 = arith.constant -1.000000e+30 : f32
    %9 = vector.broadcast %cst_5 : f32 to vector<1x8xf32>
    %10 = vector.broadcast %cst_6 : f32 to vector<1x8xf32>
    %11 = arith.select %8, %9, %10 : vector<1x8xi1>, vector<1x8xf32>
    %c8 = arith.constant 8 : index
    %c0_7 = arith.constant 0 : index
    %12 = vector.load %arg3[%c8, %c0_7] : memref<28x32xf32, #tpu.memory_space<vmem>>, vector<1x32xf32>
    %c9 = arith.constant 9 : index
    %c0_8 = arith.constant 0 : index
    %13 = vector.load %arg3[%c9, %c0_8] : memref<28x32xf32, #tpu.memory_space<vmem>>, vector<1x32xf32>
    %c10 = arith.constant 10 : index
    %c0_9 = arith.constant 0 : index
    %14 = vector.load %arg3[%c10, %c0_9] : memref<28x32xf32, #tpu.memory_space<vmem>>, vector<1x32xf32>
    %c11 = arith.constant 11 : index
    %c0_10 = arith.constant 0 : index
    %15 = vector.load %arg3[%c11, %c0_10] : memref<28x32xf32, #tpu.memory_space<vmem>>, vector<1x32xf32>
    %c12 = arith.constant 12 : index
    %c0_11 = arith.constant 0 : index
    %16 = vector.load %arg3[%c12, %c0_11] : memref<28x32xf32, #tpu.memory_space<vmem>>, vector<1x32xf32>
    %c13 = arith.constant 13 : index
    %c0_12 = arith.constant 0 : index
    %17 = vector.load %arg3[%c13, %c0_12] : memref<28x32xf32, #tpu.memory_space<vmem>>, vector<1x32xf32>
    %c14 = arith.constant 14 : index
    %c0_13 = arith.constant 0 : index
    %18 = vector.load %arg3[%c14, %c0_13] : memref<28x32xf32, #tpu.memory_space<vmem>>, vector<1x32xf32>
    %c15 = arith.constant 15 : index
    %c0_14 = arith.constant 0 : index
    %19 = vector.load %arg3[%c15, %c0_14] : memref<28x32xf32, #tpu.memory_space<vmem>>, vector<1x32xf32>
    %c16 = arith.constant 16 : index
    %c0_15 = arith.constant 0 : index
    %20 = vector.load %arg3[%c16, %c0_15] : memref<28x32xf32, #tpu.memory_space<vmem>>, vector<1x32xf32>
    %cst_16 = arith.constant dense<0.000000e+00> : vector<16xf32>
    %21 = vector.multi_reduction <add>, %5, %cst_16 [1] : vector<16x32xf32> to vector<16xf32>
    %22 = vector.shape_cast %21 : vector<16xf32> to vector<16x1xf32>
    %cst_17 = arith.constant 3.200000e+01 : f32
    %23 = vector.broadcast %cst_17 : f32 to vector<16x1xf32>
    %24 = arith.divf %22, %23 : vector<16x1xf32>
    %25 = vector.broadcast %24 : vector<16x1xf32> to vector<16x32xf32>
    %26 = arith.subf %5, %25 : vector<16x32xf32>
    %27 = arith.mulf %26, %26 : vector<16x32xf32>
    %cst_18 = arith.constant dense<0.000000e+00> : vector<16xf32>
    %28 = vector.multi_reduction <add>, %27, %cst_18 [1] : vector<16x32xf32> to vector<16xf32>
    %29 = vector.shape_cast %28 : vector<16xf32> to vector<16x1xf32>
    %cst_19 = arith.constant 3.200000e+01 : f32
    %30 = vector.broadcast %cst_19 : f32 to vector<16x1xf32>
    %31 = arith.divf %29, %30 : vector<16x1xf32>
    %32 = vector.broadcast %24 : vector<16x1xf32> to vector<16x32xf32>
    %33 = arith.subf %5, %32 : vector<16x32xf32>
    %cst_20 = arith.constant 9.99999996E-13 : f32
    %34 = vector.broadcast %cst_20 : f32 to vector<16x1xf32>
    %35 = arith.addf %31, %34 : vector<16x1xf32>
    %36 = math.rsqrt %35 : vector<16x1xf32>
    %37 = vector.broadcast %36 : vector<16x1xf32> to vector<16x32xf32>
    %38 = arith.mulf %33, %37 : vector<16x32xf32>
    %39 = vector.broadcast %12 : vector<1x32xf32> to vector<16x32xf32>
    %40 = arith.mulf %38, %39 : vector<16x32xf32>
    %41 = vector.broadcast %13 : vector<1x32xf32> to vector<16x32xf32>
    %42 = arith.addf %40, %41 : vector<16x32xf32>
    %c192 = arith.constant 192 : index
    %c0_21 = arith.constant 0 : index
    %43 = vector.load %arg1[%c192, %c0_21] : memref<576x32xf32, #tpu.memory_space<vmem>>, vector<32x32xf32>
    %cst_22 = arith.constant dense<0.000000e+00> : vector<16x32xf32>
    %44 = tpu.matmul %42, %43, %cst_22 {dimension_numbers = #tpu.dot_dimension_numbers<[1], [0], [0], [1], [0, 0, 1, 1], [], []>} : vector<16x32xf32>, vector<32x32xf32>, vector<16x32xf32> -> vector<16x32xf32>
    %45 = vector.broadcast %14 : vector<1x32xf32> to vector<16x32xf32>
    %46 = arith.addf %44, %45 : vector<16x32xf32>
    %c224 = arith.constant 224 : index
    %c0_23 = arith.constant 0 : index
    %47 = vector.load %arg1[%c224, %c0_23] : memref<576x32xf32, #tpu.memory_space<vmem>>, vector<32x32xf32>
    %cst_24 = arith.constant dense<0.000000e+00> : vector<16x32xf32>
    %48 = tpu.matmul %42, %47, %cst_24 {dimension_numbers = #tpu.dot_dimension_numbers<[1], [0], [0], [1], [0, 0, 1, 1], [], []>} : vector<16x32xf32>, vector<32x32xf32>, vector<16x32xf32> -> vector<16x32xf32>
    %49 = vector.broadcast %15 : vector<1x32xf32> to vector<16x32xf32>
    %50 = arith.addf %48, %49 : vector<16x32xf32>
    %c256 = arith.constant 256 : index
    %c0_25 = arith.constant 0 : index
    %51 = vector.load %arg1[%c256, %c0_25] : memref<576x32xf32, #tpu.memory_space<vmem>>, vector<32x32xf32>
    %cst_26 = arith.constant dense<0.000000e+00> : vector<16x32xf32>
    %52 = tpu.matmul %42, %51, %cst_26 {dimension_numbers = #tpu.dot_dimension_numbers<[1], [0], [0], [1], [0, 0, 1, 1], [], []>} : vector<16x32xf32>, vector<32x32xf32>, vector<16x32xf32> -> vector<16x32xf32>
    %53 = vector.broadcast %16 : vector<1x32xf32> to vector<16x32xf32>
    %54 = arith.addf %52, %53 : vector<16x32xf32>
    %55 = vector.shape_cast %46 : vector<16x32xf32> to vector<2x8x32xf32>
    %56 = vector.shape_cast %50 : vector<16x32xf32> to vector<2x8x32xf32>
    %57 = vector.shape_cast %54 : vector<16x32xf32> to vector<2x8x32xf32>
    %58 = vector.extract_strided_slice %55 {offsets = [0, 0, 0], sizes = [2, 8, 8], strides = [1, 1, 1]} : vector<2x8x32xf32> to vector<2x8x8xf32>
    %59 = vector.extract_strided_slice %56 {offsets = [0, 0, 0], sizes = [2, 8, 8], strides = [1, 1, 1]} : vector<2x8x32xf32> to vector<2x8x8xf32>
    %60 = vector.extract_strided_slice %57 {offsets = [0, 0, 0], sizes = [2, 8, 8], strides = [1, 1, 1]} : vector<2x8x32xf32> to vector<2x8x8xf32>
    "tpu.trace_start"() <{level = 10 : i32, message = "bqd,bkd->bqk"}> : () -> ()
    %cst_27 = arith.constant dense<0.000000e+00> : vector<2x8x8xf32>
    %61 = tpu.matmul %58, %59, %cst_27 {dimension_numbers = #tpu.dot_dimension_numbers<[2], [2], [1], [1], [0, 0, 0, 1, 1, 1], [0], [0]>} : vector<2x8x8xf32>, vector<2x8x8xf32>, vector<2x8x8xf32> -> vector<2x8x8xf32>
    "tpu.trace_stop"() : () -> ()
    %62 = vector.shape_cast %11 : vector<1x8xf32> to vector<1x1x8xf32>
    %63 = vector.broadcast %62 : vector<1x1x8xf32> to vector<2x8x8xf32>
    %64 = arith.addf %61, %63 : vector<2x8x8xf32>
    %cst_28 = arith.constant dense<0xFF800000> : vector<2x8xf32>
    %65 = vector.multi_reduction <maximumf>, %64, %cst_28 [2] : vector<2x8x8xf32> to vector<2x8xf32>
    %66 = vector.shape_cast %65 : vector<2x8xf32> to vector<2x8x1xf32>
    %67 = vector.broadcast %66 : vector<2x8x1xf32> to vector<2x8x8xf32>
    %68 = arith.subf %64, %67 : vector<2x8x8xf32>
    %69 = math.exp %68 : vector<2x8x8xf32>
    %cst_29 = arith.constant dense<0.000000e+00> : vector<2x8xf32>
    %70 = vector.multi_reduction <add>, %69, %cst_29 [2] : vector<2x8x8xf32> to vector<2x8xf32>
    %71 = vector.shape_cast %70 : vector<2x8xf32> to vector<2x8x1xf32>
    %72 = tpu.reciprocal %71 {approx = true} : vector<2x8x1xf32> -> vector<2x8x1xf32>
    %73 = vector.broadcast %72 : vector<2x8x1xf32> to vector<2x8x8xf32>
    %74 = arith.mulf %69, %73 : vector<2x8x8xf32>
    "tpu.trace_start"() <{level = 10 : i32, message = "bqk,bkd->bqd"}> : () -> ()
    %cst_30 = arith.constant dense<0.000000e+00> : vector<2x8x8xf32>
    %75 = tpu.matmul %74, %60, %cst_30 {dimension_numbers = #tpu.dot_dimension_numbers<[2], [1], [1], [2], [0, 0, 0, 1, 1, 2], [0], [0]>} : vector<2x8x8xf32>, vector<2x8x8xf32>, vector<2x8x8xf32> -> vector<2x8x8xf32>
    "tpu.trace_stop"() : () -> ()
    %76 = vector.extract_strided_slice %55 {offsets = [0, 0, 8], sizes = [2, 8, 8], strides = [1, 1, 1]} : vector<2x8x32xf32> to vector<2x8x8xf32>
    %77 = vector.extract_strided_slice %56 {offsets = [0, 0, 8], sizes = [2, 8, 8], strides = [1, 1, 1]} : vector<2x8x32xf32> to vector<2x8x8xf32>
    %78 = vector.extract_strided_slice %57 {offsets = [0, 0, 8], sizes = [2, 8, 8], strides = [1, 1, 1]} : vector<2x8x32xf32> to vector<2x8x8xf32>
    "tpu.trace_start"() <{level = 10 : i32, message = "bqd,bkd->bqk"}> : () -> ()
    %cst_31 = arith.constant dense<0.000000e+00> : vector<2x8x8xf32>
    %79 = tpu.matmul %76, %77, %cst_31 {dimension_numbers = #tpu.dot_dimension_numbers<[2], [2], [1], [1], [0, 0, 0, 1, 1, 1], [0], [0]>} : vector<2x8x8xf32>, vector<2x8x8xf32>, vector<2x8x8xf32> -> vector<2x8x8xf32>
    "tpu.trace_stop"() : () -> ()
    %80 = vector.shape_cast %11 : vector<1x8xf32> to vector<1x1x8xf32>
    %81 = vector.broadcast %80 : vector<1x1x8xf32> to vector<2x8x8xf32>
    %82 = arith.addf %79, %81 : vector<2x8x8xf32>
    %cst_32 = arith.constant dense<0xFF800000> : vector<2x8xf32>
    %83 = vector.multi_reduction <maximumf>, %82, %cst_32 [2] : vector<2x8x8xf32> to vector<2x8xf32>
    %84 = vector.shape_cast %83 : vector<2x8xf32> to vector<2x8x1xf32>
    %85 = vector.broadcast %84 : vector<2x8x1xf32> to vector<2x8x8xf32>
    %86 = arith.subf %82, %85 : vector<2x8x8xf32>
    %87 = math.exp %86 : vector<2x8x8xf32>
    %cst_33 = arith.constant dense<0.000000e+00> : vector<2x8xf32>
    %88 = vector.multi_reduction <add>, %87, %cst_33 [2] : vector<2x8x8xf32> to vector<2x8xf32>
    %89 = vector.shape_cast %88 : vector<2x8xf32> to vector<2x8x1xf32>
    %90 = tpu.reciprocal %89 {approx = true} : vector<2x8x1xf32> -> vector<2x8x1xf32>
    %91 = vector.broadcast %90 : vector<2x8x1xf32> to vector<2x8x8xf32>
    %92 = arith.mulf %87, %91 : vector<2x8x8xf32>
    "tpu.trace_start"() <{level = 10 : i32, message = "bqk,bkd->bqd"}> : () -> ()
    %cst_34 = arith.constant dense<0.000000e+00> : vector<2x8x8xf32>
    %93 = tpu.matmul %92, %78, %cst_34 {dimension_numbers = #tpu.dot_dimension_numbers<[2], [1], [1], [2], [0, 0, 0, 1, 1, 2], [0], [0]>} : vector<2x8x8xf32>, vector<2x8x8xf32>, vector<2x8x8xf32> -> vector<2x8x8xf32>
    "tpu.trace_stop"() : () -> ()
    %94 = vector.extract_strided_slice %55 {offsets = [0, 0, 16], sizes = [2, 8, 8], strides = [1, 1, 1]} : vector<2x8x32xf32> to vector<2x8x8xf32>
    %95 = vector.extract_strided_slice %56 {offsets = [0, 0, 16], sizes = [2, 8, 8], strides = [1, 1, 1]} : vector<2x8x32xf32> to vector<2x8x8xf32>
    %96 = vector.extract_strided_slice %57 {offsets = [0, 0, 16], sizes = [2, 8, 8], strides = [1, 1, 1]} : vector<2x8x32xf32> to vector<2x8x8xf32>
    "tpu.trace_start"() <{level = 10 : i32, message = "bqd,bkd->bqk"}> : () -> ()
    %cst_35 = arith.constant dense<0.000000e+00> : vector<2x8x8xf32>
    %97 = tpu.matmul %94, %95, %cst_35 {dimension_numbers = #tpu.dot_dimension_numbers<[2], [2], [1], [1], [0, 0, 0, 1, 1, 1], [0], [0]>} : vector<2x8x8xf32>, vector<2x8x8xf32>, vector<2x8x8xf32> -> vector<2x8x8xf32>
    "tpu.trace_stop"() : () -> ()
    %98 = vector.shape_cast %11 : vector<1x8xf32> to vector<1x1x8xf32>
    %99 = vector.broadcast %98 : vector<1x1x8xf32> to vector<2x8x8xf32>
    %100 = arith.addf %97, %99 : vector<2x8x8xf32>
    %cst_36 = arith.constant dense<0xFF800000> : vector<2x8xf32>
    %101 = vector.multi_reduction <maximumf>, %100, %cst_36 [2] : vector<2x8x8xf32> to vector<2x8xf32>
    %102 = vector.shape_cast %101 : vector<2x8xf32> to vector<2x8x1xf32>
    %103 = vector.broadcast %102 : vector<2x8x1xf32> to vector<2x8x8xf32>
    %104 = arith.subf %100, %103 : vector<2x8x8xf32>
    %105 = math.exp %104 : vector<2x8x8xf32>
    %cst_37 = arith.constant dense<0.000000e+00> : vector<2x8xf32>
    %106 = vector.multi_reduction <add>, %105, %cst_37 [2] : vector<2x8x8xf32> to vector<2x8xf32>
    %107 = vector.shape_cast %106 : vector<2x8xf32> to vector<2x8x1xf32>
    %108 = tpu.reciprocal %107 {approx = true} : vector<2x8x1xf32> -> vector<2x8x1xf32>
    %109 = vector.broadcast %108 : vector<2x8x1xf32> to vector<2x8x8xf32>
    %110 = arith.mulf %105, %109 : vector<2x8x8xf32>
    "tpu.trace_start"() <{level = 10 : i32, message = "bqk,bkd->bqd"}> : () -> ()
    %cst_38 = arith.constant dense<0.000000e+00> : vector<2x8x8xf32>
    %111 = tpu.matmul %110, %96, %cst_38 {dimension_numbers = #tpu.dot_dimension_numbers<[2], [1], [1], [2], [0, 0, 0, 1, 1, 2], [0], [0]>} : vector<2x8x8xf32>, vector<2x8x8xf32>, vector<2x8x8xf32> -> vector<2x8x8xf32>
    "tpu.trace_stop"() : () -> ()
    %112 = vector.extract_strided_slice %55 {offsets = [0, 0, 24], sizes = [2, 8, 8], strides = [1, 1, 1]} : vector<2x8x32xf32> to vector<2x8x8xf32>
    %113 = vector.extract_strided_slice %56 {offsets = [0, 0, 24], sizes = [2, 8, 8], strides = [1, 1, 1]} : vector<2x8x32xf32> to vector<2x8x8xf32>
    %114 = vector.extract_strided_slice %57 {offsets = [0, 0, 24], sizes = [2, 8, 8], strides = [1, 1, 1]} : vector<2x8x32xf32> to vector<2x8x8xf32>
    "tpu.trace_start"() <{level = 10 : i32, message = "bqd,bkd->bqk"}> : () -> ()
    %cst_39 = arith.constant dense<0.000000e+00> : vector<2x8x8xf32>
    %115 = tpu.matmul %112, %113, %cst_39 {dimension_numbers = #tpu.dot_dimension_numbers<[2], [2], [1], [1], [0, 0, 0, 1, 1, 1], [0], [0]>} : vector<2x8x8xf32>, vector<2x8x8xf32>, vector<2x8x8xf32> -> vector<2x8x8xf32>
    "tpu.trace_stop"() : () -> ()
    %116 = vector.shape_cast %11 : vector<1x8xf32> to vector<1x1x8xf32>
    %117 = vector.broadcast %116 : vector<1x1x8xf32> to vector<2x8x8xf32>
    %118 = arith.addf %115, %117 : vector<2x8x8xf32>
    %cst_40 = arith.constant dense<0xFF800000> : vector<2x8xf32>
    %119 = vector.multi_reduction <maximumf>, %118, %cst_40 [2] : vector<2x8x8xf32> to vector<2x8xf32>
    %120 = vector.shape_cast %119 : vector<2x8xf32> to vector<2x8x1xf32>
    %121 = vector.broadcast %120 : vector<2x8x1xf32> to vector<2x8x8xf32>
    %122 = arith.subf %118, %121 : vector<2x8x8xf32>
    %123 = math.exp %122 : vector<2x8x8xf32>
    %cst_41 = arith.constant dense<0.000000e+00> : vector<2x8xf32>
    %124 = vector.multi_reduction <add>, %123, %cst_41 [2] : vector<2x8x8xf32> to vector<2x8xf32>
    %125 = vector.shape_cast %124 : vector<2x8xf32> to vector<2x8x1xf32>
    %126 = tpu.reciprocal %125 {approx = true} : vector<2x8x1xf32> -> vector<2x8x1xf32>
    %127 = vector.broadcast %126 : vector<2x8x1xf32> to vector<2x8x8xf32>
    %128 = arith.mulf %123, %127 : vector<2x8x8xf32>
    "tpu.trace_start"() <{level = 10 : i32, message = "bqk,bkd->bqd"}> : () -> ()
    %cst_42 = arith.constant dense<0.000000e+00> : vector<2x8x8xf32>
    %129 = tpu.matmul %128, %114, %cst_42 {dimension_numbers = #tpu.dot_dimension_numbers<[2], [1], [1], [2], [0, 0, 0, 1, 1, 2], [0], [0]>} : vector<2x8x8xf32>, vector<2x8x8xf32>, vector<2x8x8xf32> -> vector<2x8x8xf32>
    "tpu.trace_stop"() : () -> ()
    %130 = tpu.concatenate %75, %93, %111, %129 in 2 : vector<2x8x8xf32>, vector<2x8x8xf32>, vector<2x8x8xf32>, vector<2x8x8xf32> -> vector<2x8x32xf32>
    %131 = vector.shape_cast %130 : vector<2x8x32xf32> to vector<16x32xf32>
    %c288 = arith.constant 288 : index
    %c0_43 = arith.constant 0 : index
    %132 = vector.load %arg1[%c288, %c0_43] : memref<576x32xf32, #tpu.memory_space<vmem>>, vector<32x32xf32>
    %cst_44 = arith.constant dense<0.000000e+00> : vector<16x32xf32>
    %133 = tpu.matmul %131, %132, %cst_44 {dimension_numbers = #tpu.dot_dimension_numbers<[1], [0], [0], [1], [0, 0, 1, 1], [], []>} : vector<16x32xf32>, vector<32x32xf32>, vector<16x32xf32> -> vector<16x32xf32>
    %134 = vector.broadcast %17 : vector<1x32xf32> to vector<16x32xf32>
    %135 = arith.addf %133, %134 : vector<16x32xf32>
    %136 = arith.addf %5, %135 : vector<16x32xf32>
    %cst_45 = arith.constant dense<0.000000e+00> : vector<16xf32>
    %137 = vector.multi_reduction <add>, %136, %cst_45 [1] : vector<16x32xf32> to vector<16xf32>
    %138 = vector.shape_cast %137 : vector<16xf32> to vector<16x1xf32>
    %cst_46 = arith.constant 3.200000e+01 : f32
    %139 = vector.broadcast %cst_46 : f32 to vector<16x1xf32>
    %140 = arith.divf %138, %139 : vector<16x1xf32>
    %141 = vector.broadcast %140 : vector<16x1xf32> to vector<16x32xf32>
    %142 = arith.subf %136, %141 : vector<16x32xf32>
    %143 = arith.mulf %142, %142 : vector<16x32xf32>
    %cst_47 = arith.constant dense<0.000000e+00> : vector<16xf32>
    %144 = vector.multi_reduction <add>, %143, %cst_47 [1] : vector<16x32xf32> to vector<16xf32>
    %145 = vector.shape_cast %144 : vector<16xf32> to vector<16x1xf32>
    %cst_48 = arith.constant 3.200000e+01 : f32
    %146 = vector.broadcast %cst_48 : f32 to vector<16x1xf32>
    %147 = arith.divf %145, %146 : vector<16x1xf32>
    %148 = vector.broadcast %140 : vector<16x1xf32> to vector<16x32xf32>
    %149 = arith.subf %136, %148 : vector<16x32xf32>
    %cst_49 = arith.constant 9.99999996E-13 : f32
    %150 = vector.broadcast %cst_49 : f32 to vector<16x1xf32>
    %151 = arith.addf %147, %150 : vector<16x1xf32>
    %152 = math.rsqrt %151 : vector<16x1xf32>
    %153 = vector.broadcast %152 : vector<16x1xf32> to vector<16x32xf32>
    %154 = arith.mulf %149, %153 : vector<16x32xf32>
    %155 = vector.broadcast %18 : vector<1x32xf32> to vector<16x32xf32>
    %156 = arith.mulf %154, %155 : vector<16x32xf32>
    %157 = vector.broadcast %19 : vector<1x32xf32> to vector<16x32xf32>
    %158 = arith.addf %156, %157 : vector<16x32xf32>
    %c0_50 = arith.constant 0 : index
    %c0_51 = arith.constant 0 : index
    %159 = vector.load %arg2[%c0_50, %c0_51] : memref<66x64xf32, #tpu.memory_space<vmem>>, vector<32x64xf32>
    %c64 = arith.constant 64 : index
    %c0_52 = arith.constant 0 : index
    %160 = vector.load %arg2[%c64, %c0_52] : memref<66x64xf32, #tpu.memory_space<vmem>>, vector<1x64xf32>
    %cst_53 = arith.constant dense<0.000000e+00> : vector<16x64xf32>
    %161 = tpu.matmul %158, %159, %cst_53 {dimension_numbers = #tpu.dot_dimension_numbers<[1], [0], [0], [1], [0, 0, 1, 1], [], []>} : vector<16x32xf32>, vector<32x64xf32>, vector<16x64xf32> -> vector<16x64xf32>
    %162 = vector.broadcast %160 : vector<1x64xf32> to vector<16x64xf32>
    %163 = arith.addf %161, %162 : vector<16x64xf32>
    %164 = arith.mulf %163, %163 : vector<16x64xf32>
    %165 = arith.mulf %163, %164 : vector<16x64xf32>
    %cst_54 = arith.constant 4.471500e-02 : f32
    %166 = vector.broadcast %cst_54 : f32 to vector<16x64xf32>
    %167 = arith.mulf %166, %165 : vector<16x64xf32>
    %168 = arith.addf %163, %167 : vector<16x64xf32>
    %cst_55 = arith.constant 0.797884583 : f32
    %169 = vector.broadcast %cst_55 : f32 to vector<16x64xf32>
    %170 = arith.mulf %169, %168 : vector<16x64xf32>
    %171 = math.tanh %170 : vector<16x64xf32>
    %cst_56 = arith.constant 1.000000e+00 : f32
    %172 = vector.broadcast %cst_56 : f32 to vector<16x64xf32>
    %173 = arith.addf %172, %171 : vector<16x64xf32>
    %cst_57 = arith.constant 5.000000e-01 : f32
    %174 = vector.broadcast %cst_57 : f32 to vector<16x64xf32>
    %175 = arith.mulf %174, %173 : vector<16x64xf32>
    %176 = arith.mulf %163, %175 : vector<16x64xf32>
    %c320 = arith.constant 320 : index
    %c0_58 = arith.constant 0 : index
    %177 = vector.load %arg1[%c320, %c0_58] : memref<576x32xf32, #tpu.memory_space<vmem>>, vector<64x32xf32>
    %cst_59 = arith.constant dense<0.000000e+00> : vector<16x32xf32>
    %178 = tpu.matmul %176, %177, %cst_59 {dimension_numbers = #tpu.dot_dimension_numbers<[1], [0], [0], [1], [0, 0, 1, 1], [], []>} : vector<16x64xf32>, vector<64x32xf32>, vector<16x32xf32> -> vector<16x32xf32>
    %179 = vector.broadcast %20 : vector<1x32xf32> to vector<16x32xf32>
    %180 = arith.addf %178, %179 : vector<16x32xf32>
    %181 = arith.addf %136, %180 : vector<16x32xf32>
    %c17 = arith.constant 17 : index
    %c0_60 = arith.constant 0 : index
    %182 = vector.load %arg3[%c17, %c0_60] : memref<28x32xf32, #tpu.memory_space<vmem>>, vector<1x32xf32>
    %c18 = arith.constant 18 : index
    %c0_61 = arith.constant 0 : index
    %183 = vector.load %arg3[%c18, %c0_61] : memref<28x32xf32, #tpu.memory_space<vmem>>, vector<1x32xf32>
    %c19 = arith.constant 19 : index
    %c0_62 = arith.constant 0 : index
    %184 = vector.load %arg3[%c19, %c0_62] : memref<28x32xf32, #tpu.memory_space<vmem>>, vector<1x32xf32>
    %c20 = arith.constant 20 : index
    %c0_63 = arith.constant 0 : index
    %185 = vector.load %arg3[%c20, %c0_63] : memref<28x32xf32, #tpu.memory_space<vmem>>, vector<1x32xf32>
    %c21 = arith.constant 21 : index
    %c0_64 = arith.constant 0 : index
    %186 = vector.load %arg3[%c21, %c0_64] : memref<28x32xf32, #tpu.memory_space<vmem>>, vector<1x32xf32>
    %c22 = arith.constant 22 : index
    %c0_65 = arith.constant 0 : index
    %187 = vector.load %arg3[%c22, %c0_65] : memref<28x32xf32, #tpu.memory_space<vmem>>, vector<1x32xf32>
    %c23 = arith.constant 23 : index
    %c0_66 = arith.constant 0 : index
    %188 = vector.load %arg3[%c23, %c0_66] : memref<28x32xf32, #tpu.memory_space<vmem>>, vector<1x32xf32>
    %c24 = arith.constant 24 : index
    %c0_67 = arith.constant 0 : index
    %189 = vector.load %arg3[%c24, %c0_67] : memref<28x32xf32, #tpu.memory_space<vmem>>, vector<1x32xf32>
    %c25 = arith.constant 25 : index
    %c0_68 = arith.constant 0 : index
    %190 = vector.load %arg3[%c25, %c0_68] : memref<28x32xf32, #tpu.memory_space<vmem>>, vector<1x32xf32>
    %cst_69 = arith.constant dense<0.000000e+00> : vector<16xf32>
    %191 = vector.multi_reduction <add>, %181, %cst_69 [1] : vector<16x32xf32> to vector<16xf32>
    %192 = vector.shape_cast %191 : vector<16xf32> to vector<16x1xf32>
    %cst_70 = arith.constant 3.200000e+01 : f32
    %193 = vector.broadcast %cst_70 : f32 to vector<16x1xf32>
    %194 = arith.divf %192, %193 : vector<16x1xf32>
    %195 = vector.broadcast %194 : vector<16x1xf32> to vector<16x32xf32>
    %196 = arith.subf %181, %195 : vector<16x32xf32>
    %197 = arith.mulf %196, %196 : vector<16x32xf32>
    %cst_71 = arith.constant dense<0.000000e+00> : vector<16xf32>
    %198 = vector.multi_reduction <add>, %197, %cst_71 [1] : vector<16x32xf32> to vector<16xf32>
    %199 = vector.shape_cast %198 : vector<16xf32> to vector<16x1xf32>
    %cst_72 = arith.constant 3.200000e+01 : f32
    %200 = vector.broadcast %cst_72 : f32 to vector<16x1xf32>
    %201 = arith.divf %199, %200 : vector<16x1xf32>
    %202 = vector.broadcast %194 : vector<16x1xf32> to vector<16x32xf32>
    %203 = arith.subf %181, %202 : vector<16x32xf32>
    %cst_73 = arith.constant 9.99999996E-13 : f32
    %204 = vector.broadcast %cst_73 : f32 to vector<16x1xf32>
    %205 = arith.addf %201, %204 : vector<16x1xf32>
    %206 = math.rsqrt %205 : vector<16x1xf32>
    %207 = vector.broadcast %206 : vector<16x1xf32> to vector<16x32xf32>
    %208 = arith.mulf %203, %207 : vector<16x32xf32>
    %209 = vector.broadcast %182 : vector<1x32xf32> to vector<16x32xf32>
    %210 = arith.mulf %208, %209 : vector<16x32xf32>
    %211 = vector.broadcast %183 : vector<1x32xf32> to vector<16x32xf32>
    %212 = arith.addf %210, %211 : vector<16x32xf32>
    %c384 = arith.constant 384 : index
    %c0_74 = arith.constant 0 : index
    %213 = vector.load %arg1[%c384, %c0_74] : memref<576x32xf32, #tpu.memory_space<vmem>>, vector<32x32xf32>
    %cst_75 = arith.constant dense<0.000000e+00> : vector<16x32xf32>
    %214 = tpu.matmul %212, %213, %cst_75 {dimension_numbers = #tpu.dot_dimension_numbers<[1], [0], [0], [1], [0, 0, 1, 1], [], []>} : vector<16x32xf32>, vector<32x32xf32>, vector<16x32xf32> -> vector<16x32xf32>
    %215 = vector.broadcast %184 : vector<1x32xf32> to vector<16x32xf32>
    %216 = arith.addf %214, %215 : vector<16x32xf32>
    %c416 = arith.constant 416 : index
    %c0_76 = arith.constant 0 : index
    %217 = vector.load %arg1[%c416, %c0_76] : memref<576x32xf32, #tpu.memory_space<vmem>>, vector<32x32xf32>
    %cst_77 = arith.constant dense<0.000000e+00> : vector<16x32xf32>
    %218 = tpu.matmul %212, %217, %cst_77 {dimension_numbers = #tpu.dot_dimension_numbers<[1], [0], [0], [1], [0, 0, 1, 1], [], []>} : vector<16x32xf32>, vector<32x32xf32>, vector<16x32xf32> -> vector<16x32xf32>
    %219 = vector.broadcast %185 : vector<1x32xf32> to vector<16x32xf32>
    %220 = arith.addf %218, %219 : vector<16x32xf32>
    %c448 = arith.constant 448 : index
    %c0_78 = arith.constant 0 : index
    %221 = vector.load %arg1[%c448, %c0_78] : memref<576x32xf32, #tpu.memory_space<vmem>>, vector<32x32xf32>
    %cst_79 = arith.constant dense<0.000000e+00> : vector<16x32xf32>
    %222 = tpu.matmul %212, %221, %cst_79 {dimension_numbers = #tpu.dot_dimension_numbers<[1], [0], [0], [1], [0, 0, 1, 1], [], []>} : vector<16x32xf32>, vector<32x32xf32>, vector<16x32xf32> -> vector<16x32xf32>
    %223 = vector.broadcast %186 : vector<1x32xf32> to vector<16x32xf32>
    %224 = arith.addf %222, %223 : vector<16x32xf32>
    %225 = vector.shape_cast %216 : vector<16x32xf32> to vector<2x8x32xf32>
    %226 = vector.shape_cast %220 : vector<16x32xf32> to vector<2x8x32xf32>
    %227 = vector.shape_cast %224 : vector<16x32xf32> to vector<2x8x32xf32>
    %228 = vector.extract_strided_slice %225 {offsets = [0, 0, 0], sizes = [2, 8, 8], strides = [1, 1, 1]} : vector<2x8x32xf32> to vector<2x8x8xf32>
    %229 = vector.extract_strided_slice %226 {offsets = [0, 0, 0], sizes = [2, 8, 8], strides = [1, 1, 1]} : vector<2x8x32xf32> to vector<2x8x8xf32>
    %230 = vector.extract_strided_slice %227 {offsets = [0, 0, 0], sizes = [2, 8, 8], strides = [1, 1, 1]} : vector<2x8x32xf32> to vector<2x8x8xf32>
    "tpu.trace_start"() <{level = 10 : i32, message = "bqd,bkd->bqk"}> : () -> ()
    %cst_80 = arith.constant dense<0.000000e+00> : vector<2x8x8xf32>
    %231 = tpu.matmul %228, %229, %cst_80 {dimension_numbers = #tpu.dot_dimension_numbers<[2], [2], [1], [1], [0, 0, 0, 1, 1, 1], [0], [0]>} : vector<2x8x8xf32>, vector<2x8x8xf32>, vector<2x8x8xf32> -> vector<2x8x8xf32>
    "tpu.trace_stop"() : () -> ()
    %232 = vector.shape_cast %11 : vector<1x8xf32> to vector<1x1x8xf32>
    %233 = vector.broadcast %232 : vector<1x1x8xf32> to vector<2x8x8xf32>
    %234 = arith.addf %231, %233 : vector<2x8x8xf32>
    %cst_81 = arith.constant dense<0xFF800000> : vector<2x8xf32>
    %235 = vector.multi_reduction <maximumf>, %234, %cst_81 [2] : vector<2x8x8xf32> to vector<2x8xf32>
    %236 = vector.shape_cast %235 : vector<2x8xf32> to vector<2x8x1xf32>
    %237 = vector.broadcast %236 : vector<2x8x1xf32> to vector<2x8x8xf32>
    %238 = arith.subf %234, %237 : vector<2x8x8xf32>
    %239 = math.exp %238 : vector<2x8x8xf32>
    %cst_82 = arith.constant dense<0.000000e+00> : vector<2x8xf32>
    %240 = vector.multi_reduction <add>, %239, %cst_82 [2] : vector<2x8x8xf32> to vector<2x8xf32>
    %241 = vector.shape_cast %240 : vector<2x8xf32> to vector<2x8x1xf32>
    %242 = tpu.reciprocal %241 {approx = true} : vector<2x8x1xf32> -> vector<2x8x1xf32>
    %243 = vector.broadcast %242 : vector<2x8x1xf32> to vector<2x8x8xf32>
    %244 = arith.mulf %239, %243 : vector<2x8x8xf32>
    "tpu.trace_start"() <{level = 10 : i32, message = "bqk,bkd->bqd"}> : () -> ()
    %cst_83 = arith.constant dense<0.000000e+00> : vector<2x8x8xf32>
    %245 = tpu.matmul %244, %230, %cst_83 {dimension_numbers = #tpu.dot_dimension_numbers<[2], [1], [1], [2], [0, 0, 0, 1, 1, 2], [0], [0]>} : vector<2x8x8xf32>, vector<2x8x8xf32>, vector<2x8x8xf32> -> vector<2x8x8xf32>
    "tpu.trace_stop"() : () -> ()
    %246 = vector.extract_strided_slice %225 {offsets = [0, 0, 8], sizes = [2, 8, 8], strides = [1, 1, 1]} : vector<2x8x32xf32> to vector<2x8x8xf32>
    %247 = vector.extract_strided_slice %226 {offsets = [0, 0, 8], sizes = [2, 8, 8], strides = [1, 1, 1]} : vector<2x8x32xf32> to vector<2x8x8xf32>
    %248 = vector.extract_strided_slice %227 {offsets = [0, 0, 8], sizes = [2, 8, 8], strides = [1, 1, 1]} : vector<2x8x32xf32> to vector<2x8x8xf32>
    "tpu.trace_start"() <{level = 10 : i32, message = "bqd,bkd->bqk"}> : () -> ()
    %cst_84 = arith.constant dense<0.000000e+00> : vector<2x8x8xf32>
    %249 = tpu.matmul %246, %247, %cst_84 {dimension_numbers = #tpu.dot_dimension_numbers<[2], [2], [1], [1], [0, 0, 0, 1, 1, 1], [0], [0]>} : vector<2x8x8xf32>, vector<2x8x8xf32>, vector<2x8x8xf32> -> vector<2x8x8xf32>
    "tpu.trace_stop"() : () -> ()
    %250 = vector.shape_cast %11 : vector<1x8xf32> to vector<1x1x8xf32>
    %251 = vector.broadcast %250 : vector<1x1x8xf32> to vector<2x8x8xf32>
    %252 = arith.addf %249, %251 : vector<2x8x8xf32>
    %cst_85 = arith.constant dense<0xFF800000> : vector<2x8xf32>
    %253 = vector.multi_reduction <maximumf>, %252, %cst_85 [2] : vector<2x8x8xf32> to vector<2x8xf32>
    %254 = vector.shape_cast %253 : vector<2x8xf32> to vector<2x8x1xf32>
    %255 = vector.broadcast %254 : vector<2x8x1xf32> to vector<2x8x8xf32>
    %256 = arith.subf %252, %255 : vector<2x8x8xf32>
    %257 = math.exp %256 : vector<2x8x8xf32>
    %cst_86 = arith.constant dense<0.000000e+00> : vector<2x8xf32>
    %258 = vector.multi_reduction <add>, %257, %cst_86 [2] : vector<2x8x8xf32> to vector<2x8xf32>
    %259 = vector.shape_cast %258 : vector<2x8xf32> to vector<2x8x1xf32>
    %260 = tpu.reciprocal %259 {approx = true} : vector<2x8x1xf32> -> vector<2x8x1xf32>
    %261 = vector.broadcast %260 : vector<2x8x1xf32> to vector<2x8x8xf32>
    %262 = arith.mulf %257, %261 : vector<2x8x8xf32>
    "tpu.trace_start"() <{level = 10 : i32, message = "bqk,bkd->bqd"}> : () -> ()
    %cst_87 = arith.constant dense<0.000000e+00> : vector<2x8x8xf32>
    %263 = tpu.matmul %262, %248, %cst_87 {dimension_numbers = #tpu.dot_dimension_numbers<[2], [1], [1], [2], [0, 0, 0, 1, 1, 2], [0], [0]>} : vector<2x8x8xf32>, vector<2x8x8xf32>, vector<2x8x8xf32> -> vector<2x8x8xf32>
    "tpu.trace_stop"() : () -> ()
    %264 = vector.extract_strided_slice %225 {offsets = [0, 0, 16], sizes = [2, 8, 8], strides = [1, 1, 1]} : vector<2x8x32xf32> to vector<2x8x8xf32>
    %265 = vector.extract_strided_slice %226 {offsets = [0, 0, 16], sizes = [2, 8, 8], strides = [1, 1, 1]} : vector<2x8x32xf32> to vector<2x8x8xf32>
    %266 = vector.extract_strided_slice %227 {offsets = [0, 0, 16], sizes = [2, 8, 8], strides = [1, 1, 1]} : vector<2x8x32xf32> to vector<2x8x8xf32>
    "tpu.trace_start"() <{level = 10 : i32, message = "bqd,bkd->bqk"}> : () -> ()
    %cst_88 = arith.constant dense<0.000000e+00> : vector<2x8x8xf32>
    %267 = tpu.matmul %264, %265, %cst_88 {dimension_numbers = #tpu.dot_dimension_numbers<[2], [2], [1], [1], [0, 0, 0, 1, 1, 1], [0], [0]>} : vector<2x8x8xf32>, vector<2x8x8xf32>, vector<2x8x8xf32> -> vector<2x8x8xf32>
    "tpu.trace_stop"() : () -> ()
    %268 = vector.shape_cast %11 : vector<1x8xf32> to vector<1x1x8xf32>
    %269 = vector.broadcast %268 : vector<1x1x8xf32> to vector<2x8x8xf32>
    %270 = arith.addf %267, %269 : vector<2x8x8xf32>
    %cst_89 = arith.constant dense<0xFF800000> : vector<2x8xf32>
    %271 = vector.multi_reduction <maximumf>, %270, %cst_89 [2] : vector<2x8x8xf32> to vector<2x8xf32>
    %272 = vector.shape_cast %271 : vector<2x8xf32> to vector<2x8x1xf32>
    %273 = vector.broadcast %272 : vector<2x8x1xf32> to vector<2x8x8xf32>
    %274 = arith.subf %270, %273 : vector<2x8x8xf32>
    %275 = math.exp %274 : vector<2x8x8xf32>
    %cst_90 = arith.constant dense<0.000000e+00> : vector<2x8xf32>
    %276 = vector.multi_reduction <add>, %275, %cst_90 [2] : vector<2x8x8xf32> to vector<2x8xf32>
    %277 = vector.shape_cast %276 : vector<2x8xf32> to vector<2x8x1xf32>
    %278 = tpu.reciprocal %277 {approx = true} : vector<2x8x1xf32> -> vector<2x8x1xf32>
    %279 = vector.broadcast %278 : vector<2x8x1xf32> to vector<2x8x8xf32>
    %280 = arith.mulf %275, %279 : vector<2x8x8xf32>
    "tpu.trace_start"() <{level = 10 : i32, message = "bqk,bkd->bqd"}> : () -> ()
    %cst_91 = arith.constant dense<0.000000e+00> : vector<2x8x8xf32>
    %281 = tpu.matmul %280, %266, %cst_91 {dimension_numbers = #tpu.dot_dimension_numbers<[2], [1], [1], [2], [0, 0, 0, 1, 1, 2], [0], [0]>} : vector<2x8x8xf32>, vector<2x8x8xf32>, vector<2x8x8xf32> -> vector<2x8x8xf32>
    "tpu.trace_stop"() : () -> ()
    %282 = vector.extract_strided_slice %225 {offsets = [0, 0, 24], sizes = [2, 8, 8], strides = [1, 1, 1]} : vector<2x8x32xf32> to vector<2x8x8xf32>
    %283 = vector.extract_strided_slice %226 {offsets = [0, 0, 24], sizes = [2, 8, 8], strides = [1, 1, 1]} : vector<2x8x32xf32> to vector<2x8x8xf32>
    %284 = vector.extract_strided_slice %227 {offsets = [0, 0, 24], sizes = [2, 8, 8], strides = [1, 1, 1]} : vector<2x8x32xf32> to vector<2x8x8xf32>
    "tpu.trace_start"() <{level = 10 : i32, message = "bqd,bkd->bqk"}> : () -> ()
    %cst_92 = arith.constant dense<0.000000e+00> : vector<2x8x8xf32>
    %285 = tpu.matmul %282, %283, %cst_92 {dimension_numbers = #tpu.dot_dimension_numbers<[2], [2], [1], [1], [0, 0, 0, 1, 1, 1], [0], [0]>} : vector<2x8x8xf32>, vector<2x8x8xf32>, vector<2x8x8xf32> -> vector<2x8x8xf32>
    "tpu.trace_stop"() : () -> ()
    %286 = vector.shape_cast %11 : vector<1x8xf32> to vector<1x1x8xf32>
    %287 = vector.broadcast %286 : vector<1x1x8xf32> to vector<2x8x8xf32>
    %288 = arith.addf %285, %287 : vector<2x8x8xf32>
    %cst_93 = arith.constant dense<0xFF800000> : vector<2x8xf32>
    %289 = vector.multi_reduction <maximumf>, %288, %cst_93 [2] : vector<2x8x8xf32> to vector<2x8xf32>
    %290 = vector.shape_cast %289 : vector<2x8xf32> to vector<2x8x1xf32>
    %291 = vector.broadcast %290 : vector<2x8x1xf32> to vector<2x8x8xf32>
    %292 = arith.subf %288, %291 : vector<2x8x8xf32>
    %293 = math.exp %292 : vector<2x8x8xf32>
    %cst_94 = arith.constant dense<0.000000e+00> : vector<2x8xf32>
    %294 = vector.multi_reduction <add>, %293, %cst_94 [2] : vector<2x8x8xf32> to vector<2x8xf32>
    %295 = vector.shape_cast %294 : vector<2x8xf32> to vector<2x8x1xf32>
    %296 = tpu.reciprocal %295 {approx = true} : vector<2x8x1xf32> -> vector<2x8x1xf32>
    %297 = vector.broadcast %296 : vector<2x8x1xf32> to vector<2x8x8xf32>
    %298 = arith.mulf %293, %297 : vector<2x8x8xf32>
    "tpu.trace_start"() <{level = 10 : i32, message = "bqk,bkd->bqd"}> : () -> ()
    %cst_95 = arith.constant dense<0.000000e+00> : vector<2x8x8xf32>
    %299 = tpu.matmul %298, %284, %cst_95 {dimension_numbers = #tpu.dot_dimension_numbers<[2], [1], [1], [2], [0, 0, 0, 1, 1, 2], [0], [0]>} : vector<2x8x8xf32>, vector<2x8x8xf32>, vector<2x8x8xf32> -> vector<2x8x8xf32>
    "tpu.trace_stop"() : () -> ()
    %300 = tpu.concatenate %245, %263, %281, %299 in 2 : vector<2x8x8xf32>, vector<2x8x8xf32>, vector<2x8x8xf32>, vector<2x8x8xf32> -> vector<2x8x32xf32>
    %301 = vector.shape_cast %300 : vector<2x8x32xf32> to vector<16x32xf32>
    %c480 = arith.constant 480 : index
    %c0_96 = arith.constant 0 : index
    %302 = vector.load %arg1[%c480, %c0_96] : memref<576x32xf32, #tpu.memory_space<vmem>>, vector<32x32xf32>
    %cst_97 = arith.constant dense<0.000000e+00> : vector<16x32xf32>
    %303 = tpu.matmul %301, %302, %cst_97 {dimension_numbers = #tpu.dot_dimension_numbers<[1], [0], [0], [1], [0, 0, 1, 1], [], []>} : vector<16x32xf32>, vector<32x32xf32>, vector<16x32xf32> -> vector<16x32xf32>
    %304 = vector.broadcast %187 : vector<1x32xf32> to vector<16x32xf32>
    %305 = arith.addf %303, %304 : vector<16x32xf32>
    %306 = arith.addf %181, %305 : vector<16x32xf32>
    %cst_98 = arith.constant dense<0.000000e+00> : vector<16xf32>
    %307 = vector.multi_reduction <add>, %306, %cst_98 [1] : vector<16x32xf32> to vector<16xf32>
    %308 = vector.shape_cast %307 : vector<16xf32> to vector<16x1xf32>
    %cst_99 = arith.constant 3.200000e+01 : f32
    %309 = vector.broadcast %cst_99 : f32 to vector<16x1xf32>
    %310 = arith.divf %308, %309 : vector<16x1xf32>
    %311 = vector.broadcast %310 : vector<16x1xf32> to vector<16x32xf32>
    %312 = arith.subf %306, %311 : vector<16x32xf32>
    %313 = arith.mulf %312, %312 : vector<16x32xf32>
    %cst_100 = arith.constant dense<0.000000e+00> : vector<16xf32>
    %314 = vector.multi_reduction <add>, %313, %cst_100 [1] : vector<16x32xf32> to vector<16xf32>
    %315 = vector.shape_cast %314 : vector<16xf32> to vector<16x1xf32>
    %cst_101 = arith.constant 3.200000e+01 : f32
    %316 = vector.broadcast %cst_101 : f32 to vector<16x1xf32>
    %317 = arith.divf %315, %316 : vector<16x1xf32>
    %318 = vector.broadcast %310 : vector<16x1xf32> to vector<16x32xf32>
    %319 = arith.subf %306, %318 : vector<16x32xf32>
    %cst_102 = arith.constant 9.99999996E-13 : f32
    %320 = vector.broadcast %cst_102 : f32 to vector<16x1xf32>
    %321 = arith.addf %317, %320 : vector<16x1xf32>
    %322 = math.rsqrt %321 : vector<16x1xf32>
    %323 = vector.broadcast %322 : vector<16x1xf32> to vector<16x32xf32>
    %324 = arith.mulf %319, %323 : vector<16x32xf32>
    %325 = vector.broadcast %188 : vector<1x32xf32> to vector<16x32xf32>
    %326 = arith.mulf %324, %325 : vector<16x32xf32>
    %327 = vector.broadcast %189 : vector<1x32xf32> to vector<16x32xf32>
    %328 = arith.addf %326, %327 : vector<16x32xf32>
    %c32 = arith.constant 32 : index
    %c0_103 = arith.constant 0 : index
    %329 = vector.load %arg2[%c32, %c0_103] : memref<66x64xf32, #tpu.memory_space<vmem>>, vector<32x64xf32>
    %c65 = arith.constant 65 : index
    %c0_104 = arith.constant 0 : index
    %330 = vector.load %arg2[%c65, %c0_104] : memref<66x64xf32, #tpu.memory_space<vmem>>, vector<1x64xf32>
    %cst_105 = arith.constant dense<0.000000e+00> : vector<16x64xf32>
    %331 = tpu.matmul %328, %329, %cst_105 {dimension_numbers = #tpu.dot_dimension_numbers<[1], [0], [0], [1], [0, 0, 1, 1], [], []>} : vector<16x32xf32>, vector<32x64xf32>, vector<16x64xf32> -> vector<16x64xf32>
    %332 = vector.broadcast %330 : vector<1x64xf32> to vector<16x64xf32>
    %333 = arith.addf %331, %332 : vector<16x64xf32>
    %334 = arith.mulf %333, %333 : vector<16x64xf32>
    %335 = arith.mulf %333, %334 : vector<16x64xf32>
    %cst_106 = arith.constant 4.471500e-02 : f32
    %336 = vector.broadcast %cst_106 : f32 to vector<16x64xf32>
    %337 = arith.mulf %336, %335 : vector<16x64xf32>
    %338 = arith.addf %333, %337 : vector<16x64xf32>
    %cst_107 = arith.constant 0.797884583 : f32
    %339 = vector.broadcast %cst_107 : f32 to vector<16x64xf32>
    %340 = arith.mulf %339, %338 : vector<16x64xf32>
    %341 = math.tanh %340 : vector<16x64xf32>
    %cst_108 = arith.constant 1.000000e+00 : f32
    %342 = vector.broadcast %cst_108 : f32 to vector<16x64xf32>
    %343 = arith.addf %342, %341 : vector<16x64xf32>
    %cst_109 = arith.constant 5.000000e-01 : f32
    %344 = vector.broadcast %cst_109 : f32 to vector<16x64xf32>
    %345 = arith.mulf %344, %343 : vector<16x64xf32>
    %346 = arith.mulf %333, %345 : vector<16x64xf32>
    %c512 = arith.constant 512 : index
    %c0_110 = arith.constant 0 : index
    %347 = vector.load %arg1[%c512, %c0_110] : memref<576x32xf32, #tpu.memory_space<vmem>>, vector<64x32xf32>
    %cst_111 = arith.constant dense<0.000000e+00> : vector<16x32xf32>
    %348 = tpu.matmul %346, %347, %cst_111 {dimension_numbers = #tpu.dot_dimension_numbers<[1], [0], [0], [1], [0, 0, 1, 1], [], []>} : vector<16x64xf32>, vector<64x32xf32>, vector<16x32xf32> -> vector<16x32xf32>
    %349 = vector.broadcast %190 : vector<1x32xf32> to vector<16x32xf32>
    %350 = arith.addf %348, %349 : vector<16x32xf32>
    %351 = arith.addf %306, %350 : vector<16x32xf32>
    %352 = vector.extract_strided_slice %351 {offsets = [0, 0], sizes = [1, 32], strides = [1, 1]} : vector<16x32xf32> to vector<1x32xf32>
    %353 = vector.extract_strided_slice %351 {offsets = [8, 0], sizes = [1, 32], strides = [1, 1]} : vector<16x32xf32> to vector<1x32xf32>
    %354 = tpu.concatenate %352, %353 in 0 : vector<1x32xf32>, vector<1x32xf32> -> vector<2x32xf32>
    %c26 = arith.constant 26 : index
    %c0_112 = arith.constant 0 : index
    %355 = vector.load %arg3[%c26, %c0_112] : memref<28x32xf32, #tpu.memory_space<vmem>>, vector<1x32xf32>
    %c27 = arith.constant 27 : index
    %c0_113 = arith.constant 0 : index
    %356 = vector.load %arg3[%c27, %c0_113] : memref<28x32xf32, #tpu.memory_space<vmem>>, vector<1x32xf32>
    %cst_114 = arith.constant dense<0.000000e+00> : vector<2xf32>
    %357 = vector.multi_reduction <add>, %354, %cst_114 [1] : vector<2x32xf32> to vector<2xf32>
    %358 = vector.shape_cast %357 : vector<2xf32> to vector<2x1xf32>
    %cst_115 = arith.constant 3.200000e+01 : f32
    %359 = vector.broadcast %cst_115 : f32 to vector<2x1xf32>
    %360 = arith.divf %358, %359 : vector<2x1xf32>
    %361 = vector.broadcast %360 : vector<2x1xf32> to vector<2x32xf32>
    %362 = arith.subf %354, %361 : vector<2x32xf32>
    %363 = arith.mulf %362, %362 : vector<2x32xf32>
    %cst_116 = arith.constant dense<0.000000e+00> : vector<2xf32>
    %364 = vector.multi_reduction <add>, %363, %cst_116 [1] : vector<2x32xf32> to vector<2xf32>
    %365 = vector.shape_cast %364 : vector<2xf32> to vector<2x1xf32>
    %cst_117 = arith.constant 3.200000e+01 : f32
    %366 = vector.broadcast %cst_117 : f32 to vector<2x1xf32>
    %367 = arith.divf %365, %366 : vector<2x1xf32>
    %368 = vector.broadcast %360 : vector<2x1xf32> to vector<2x32xf32>
    %369 = arith.subf %354, %368 : vector<2x32xf32>
    %cst_118 = arith.constant 9.99999996E-13 : f32
    %370 = vector.broadcast %cst_118 : f32 to vector<2x1xf32>
    %371 = arith.addf %367, %370 : vector<2x1xf32>
    %372 = math.rsqrt %371 : vector<2x1xf32>
    %373 = vector.broadcast %372 : vector<2x1xf32> to vector<2x32xf32>
    %374 = arith.mulf %369, %373 : vector<2x32xf32>
    %375 = vector.broadcast %355 : vector<1x32xf32> to vector<2x32xf32>
    %376 = arith.mulf %374, %375 : vector<2x32xf32>
    %377 = vector.broadcast %356 : vector<1x32xf32> to vector<2x32xf32>
    %378 = arith.addf %376, %377 : vector<2x32xf32>
    %c0_119 = arith.constant 0 : index
    %c0_120 = arith.constant 0 : index
    %379 = vector.load %arg4[%c0_119, %c0_120] : memref<33x128xf32, #tpu.memory_space<vmem>>, vector<32x128xf32>
    %cst_121 = arith.constant dense<0.000000e+00> : vector<2x128xf32>
    %380 = tpu.matmul %378, %379, %cst_121 {dimension_numbers = #tpu.dot_dimension_numbers<[1], [0], [0], [1], [0, 0, 1, 1], [], []>} : vector<2x32xf32>, vector<32x128xf32>, vector<2x128xf32> -> vector<2x128xf32>
    %c32_122 = arith.constant 32 : index
    %c0_123 = arith.constant 0 : index
    %381 = vector.load %arg4[%c32_122, %c0_123] : memref<33x128xf32, #tpu.memory_space<vmem>>, vector<1x128xf32>
    %382 = vector.broadcast %381 : vector<1x128xf32> to vector<2x128xf32>
    %383 = arith.addf %380, %382 : vector<2x128xf32>
    %c0_124 = arith.constant 0 : index
    %c0_125 = arith.constant 0 : index
    %384 = vector.load %arg5[%c0_124, %c0_125] : memref<2x128xf32, #tpu.memory_space<vmem>>, vector<2x128xf32>
    tpu.vector_store %arg5[%c0_124, %c0_125], %383 {strides = array<i32>} : memref<2x128xf32, #tpu.memory_space<vmem>>, vector<2x128xf32>,
    return
  }
}

</mosaic_0001>

<llo_original>
// kernel: vit_object_detection.1
$region0: #{vit_object_detection.1}
  #allocation0 [shape = 'u32[]', space=smem, size = 0x4, offset = 0x4, fixed_abs, tag = 'smem constant byte address 0x4 - core index']
  #allocation1 [shape = 'u32[72,128]{1,0:T(1,128)}', space=vmem, size = 0x9000, scoped, tag = 'internal scratch']
  %s0 = inlined_call_operand.vmem [shape: f32[16,192], index: 0, kind: input, shape index: {}]
  %s1 = inlined_call_operand.vmem [shape: f32[576,32], index: 1, kind: input, shape index: {}]
  %s2 = inlined_call_operand.vmem [shape: f32[66,64], index: 2, kind: input, shape index: {}]
  %s3 = inlined_call_operand.vmem [shape: f32[28,32], index: 3, kind: input, shape index: {}]
  %s4 = inlined_call_operand.vmem [shape: f32[33,128], index: 4, kind: input, shape index: {}]
  %s5 = inlined_call_operand.vmem [shape: f32[2,128], index: 5, kind: output, shape index: {}]
  %s6 = sld [smem:[#allocation0]]
  $region30: #{vit_object_detection.1} parent=0
    _
  %s8 = ssub.s32 1, %s6
  %s9 = scalar_select 0, %s8, %s6
  // Predicated region
  $region2: #{vit_object_detection.1} parent=0 // pred_check
    _
  $region3: #{vit_object_detection.1} parent=0 // pred_check_branch
    %11 = sbr.rel (0) target = $region5
  $region4: #{vit_object_detection.1} parent=0 // pred_region
    _
  $region5: #{vit_object_detection.1} parent=0 // pred_fallthru
    _
  // Predicated region
  $region6: #{vit_object_detection.1} parent=0 // pred_check
    _
  $region7: #{vit_object_detection.1} parent=0 // pred_check_branch
    %13 = sbr.rel (0) target = $region9
  $region8: #{vit_object_detection.1} parent=0 // pred_region
    _
  $region9: #{vit_object_detection.1} parent=0 // pred_fallthru
    _
  // Predicated region
  $region10: #{vit_object_detection.1} parent=0 // pred_check
    _
  $region11: #{vit_object_detection.1} parent=0 // pred_check_branch
    %15 = sbr.rel (0) target = $region13
  $region12: #{vit_object_detection.1} parent=0 // pred_region
    _
  $region13: #{vit_object_detection.1} parent=0 // pred_fallthru
    _
  // Predicated region
  $region14: #{vit_object_detection.1} parent=0 // pred_check
    _
  $region15: #{vit_object_detection.1} parent=0 // pred_check_branch
    %17 = sbr.rel (0) target = $region17
  $region16: #{vit_object_detection.1} parent=0 // pred_region
    _
  $region17: #{vit_object_detection.1} parent=0 // pred_fallthru
    _
  // Predicated region
  $region18: #{vit_object_detection.1} parent=0 // pred_check
    _
  $region19: #{vit_object_detection.1} parent=0 // pred_check_branch
    %19 = sbr.rel (0) target = $region21
  $region20: #{vit_object_detection.1} parent=0 // pred_region
    _
  $region21: #{vit_object_detection.1} parent=0 // pred_fallthru
    _
  %v20 = vld [vmem:[%s0] sm:$0xff]
  %v21 = vld [vmem:[%s0 + $0x8] sm:$0xff]
  %v22 = vld [vmem:[%s0 + $0x10] sm:$0xff]
  %v23 = vld [vmem:[%s0 + $0x18] sm:$0xff]
  %v24 = vld [vmem:[%s1] sm:$0xff]
  %v25 = vld [vmem:[%s1 + $0x8] sm:$0xff]
  %v26 = vld [vmem:[%s1 + $0x10] sm:$0xff]
  %v27 = vld [vmem:[%s1 + $0x18] sm:$0xff]
  %v28 = vld [vmem:[%s1 + $0x20] sm:$0xff]
  %v29 = vld [vmem:[%s1 + $0x28] sm:$0xff]
  %v30 = vld [vmem:[%s1 + $0x30] sm:$0xff]
  %v31 = vld [vmem:[%s1 + $0x38] sm:$0xff]
  %v32 = vld [vmem:[%s1 + $0x40] sm:$0xff]
  %v33 = vld [vmem:[%s1 + $0x48] sm:$0xff]
  %v34 = vld [vmem:[%s1 + $0x50] sm:$0xff]
  %v35 = vld [vmem:[%s1 + $0x58] sm:$0xff]
  %v36 = vld [vmem:[%s1 + $0x60] sm:$0xff]
  %v37 = vld [vmem:[%s1 + $0x68] sm:$0xff]
  %v38 = vld [vmem:[%s1 + $0x70] sm:$0xff]
  %v39 = vld [vmem:[%s1 + $0x78] sm:$0xff]
  %v40 = vld [vmem:[%s1 + $0x80] sm:$0xff]
  %v41 = vld [vmem:[%s1 + $0x88] sm:$0xff]
  %v42 = vld [vmem:[%s1 + $0x90] sm:$0xff]
  %v43 = vld [vmem:[%s1 + $0x98] sm:$0xff]
  %v44 = vld [vmem:[%s1 + $0xa0] sm:$0xff]
  %v45 = vld [vmem:[%s1 + $0xa8] sm:$0xff]
  %v46 = vld [vmem:[%s1 + $0xb0] sm:$0xff]
  %v47 = vld [vmem:[%s1 + $0xb8] sm:$0xff]
  %v48 = vld [vmem:[%s3] sm:$0xff]
  %vm49 = vcmask 523264
  %v51 = vsel %vm49, %v21, 0
  %v54 = vsel %vm49, %v23, 0
  %56 = vmatpush.msra.mxu0 %v39
  %57 = vmatpush.msra.mxu0 %v38
  %58 = vmatpush.msra.mxu0 %v37
  %59 = vmatpush.msra.mxu0 %v36
  %60 = vmatpush.msra.mxu0 %v35
  %61 = vmatpush.msra.mxu0 %v34
  %62 = vmatpush.msra.mxu0 %v33
  %63 = vmatpush.msra.mxu0 %v32
  %64 = vmatpush.msra.mxu0 %v31
  %65 = vmatpush.msra.mxu0 %v30
  %66 = vmatpush.msra.mxu0 %v29
  %67 = vmatpush.msra.mxu0 %v28
  %68 = vmatpush.msra.mxu0 %v27
  %69 = vmatpush.msra.mxu0 %v26
  %70 = vmatpush.msra.mxu0 %v25
  %71 = vmatpush.msra.mxu0 %v24
  %72 = vmatmul.f32.gmra.mxu0 %v20
  %v73 = vpop.f32.mrf.mxu0
  %v74 = vadd.f32 %v48, %v73
  %75 = vmatmul.f32.gmra.mxu0 %v22
  %v76 = vpop.f32.mrf.mxu0
  %v77 = vadd.f32 %v48, %v76
  %78 = vdwg.mxu0
  %79 = vmatpush.msra.mxu0 0.0
  %80 = vmatpush.msra.mxu0 0.0
  %81 = vmatpush.msra.mxu0 0.0
  %82 = vmatpush.msra.mxu0 0.0
  %83 = vmatpush.msra.mxu0 0.0
  %84 = vmatpush.msra.mxu0 0.0
  %85 = vmatpush.msra.mxu0 0.0
  %86 = vmatpush.msra.mxu0 0.0
  %87 = vmatpush.msra.mxu0 %v47
  %88 = vmatpush.msra.mxu0 %v46
  %89 = vmatpush.msra.mxu0 %v45
  %90 = vmatpush.msra.mxu0 %v44
  %91 = vmatpush.msra.mxu0 %v43
  %92 = vmatpush.msra.mxu0 %v42
  %93 = vmatpush.msra.mxu0 %v41
  %94 = vmatpush.msra.mxu0 %v40
  %95 = vmatmul.f32.gmra.mxu0 %v51
  %v96 = vpop.f32.mrf.mxu0
  %v97 = vadd.f32 %v74, %v96
  %98 = vmatmul.f32.gmra.mxu0 %v54
  %v99 = vpop.f32.mrf.mxu0
  %v100 = vadd.f32 %v77, %v99
  %101 = vdwg.mxu0
  %v102 = vlaneseq
  %v103 = vand.u32 %v102, 127
  %vm104 = vcmp.lt.s32.totalorder %v103, 5
  %v105 = vsel %vm104, 0.0, -1e+30
  %v106 = vld [vmem:[%s3 + $0x8] sm:$0x1]
  %v107 = vld [vmem:[%s3 + $0x9] sm:$0x1]
  %v108 = vld [vmem:[%s3 + $0xa] sm:$0x1]
  %v109 = vld [vmem:[%s3 + $0xb] sm:$0x1]
  %v110 = vld [vmem:[%s3 + $0xc] sm:$0x1]
  %v111 = vld [vmem:[%s3 + $0xd] sm:$0x1]
  %v112 = vld [vmem:[%s3 + $0xe] sm:$0x1]
  %v113 = vld [vmem:[%s3 + $0xf] sm:$0x1]
  %v114 = vld [vmem:[%s3 + $0x10] sm:$0x1]
  %vm115 = vcmask 261120
  %v116 = vsel %vm115, %v97, 0.0
  %117 = vadd.xlane.f32.xlu0 %v116
  %v118 = vpop.xlane.xlu0 %117
  %v119 = vsel %vm115, %v100, 0.0
  %120 = vadd.xlane.f32.xlu0 %v119
  %v121 = vpop.xlane.xlu0 %120
  %v122 = vrcp.pop 32.0
  %v123 = vmul.f32 32.0, %v122
  %v124 = vsub.f32 1.0, %v123
  %v125 = vmul.f32 %v122, %v124
  %v126 = vadd.f32 %v122, %v125
  %vm127 = vweird.f32 %v122
  %v128 = vsel %vm127, %v122, %v126
  %v129 = vmul.f32 %v118, %v128
  %v130 = vmul.f32 %v121, %v128
  %v131 = vsub.f32 %v97, %v129
  %v132 = vsub.f32 %v100, %v130
  %v133 = vmul.f32 %v131, %v131
  %v134 = vmul.f32 %v132, %v132
  %v135 = vsel %vm115, %v133, 0.0
  %136 = vadd.xlane.f32.xlu0 %v135
  %v137 = vpop.xlane.xlu0 %136
  %v138 = vsel %vm115, %v134, 0.0
  %139 = vadd.xlane.f32.xlu0 %v138
  %v140 = vpop.xlane.xlu0 %139
  %v141 = vmul.f32 %v137, %v128
  %v142 = vmul.f32 %v140, %v128
  %v143 = vadd.f32 %v141, 1e-12
  %v144 = vadd.f32 %v142, 1e-12
  %v145 = vrsqrt.pop %v143
  %v146 = vmul.f32 %v145, %v143
  %v147 = vmul.f32 %v146, %v145
  %v148 = vmul.f32 0.5, %v147
  %v149 = vsub.f32 1.5, %v148
  %v150 = vmul.f32 %v145, %v149
  %vm151 = vweird.f32 %v143
  %vm152 = vweird.f32 %v145
  %vm153 = vmor %vm151, %vm152
  %v154 = vsel %vm153, %v145, %v150
  %v155 = vrsqrt.pop %v144
  %v156 = vmul.f32 %v155, %v144
  %v157 = vmul.f32 %v156, %v155
  %v158 = vmul.f32 0.5, %v157
  %v159 = vsub.f32 1.5, %v158
  %v160 = vmul.f32 %v155, %v159
  %vm161 = vweird.f32 %v144
  %vm162 = vweird.f32 %v155
  %vm163 = vmor %vm161, %vm162
  %v164 = vsel %vm163, %v155, %v160
  %v165 = vmul.f32 %v131, %v154
  %v166 = vmul.f32 %v132, %v164
  %v167 = vperm.slane %v106, 0
  %v168 = vmul.f32 %v165, %v167
  %v169 = vmul.f32 %v166, %v167
  %v170 = vperm.slane %v107, 0
  %v171 = vadd.f32 %v168, %v170
  %v172 = vadd.f32 %v169, %v170
  %v173 = vld [vmem:[%s1 + $0xc0] sm:$0xff]
  %v174 = vld [vmem:[%s1 + $0xc8] sm:$0xff]
  %v175 = vld [vmem:[%s1 + $0xd0] sm:$0xff]
  %v176 = vld [vmem:[%s1 + $0xd8] sm:$0xff]
  %v177 = vperm.slane %v108, 0
  %v179 = vsel %vm115, %v171, 0
  %v182 = vsel %vm115, %v172, 0
  %184 = vmatpush.msra.mxu0 0.0
  %185 = vmatpush.msra.mxu0 0.0
  %186 = vmatpush.msra.mxu0 0.0
  %187 = vmatpush.msra.mxu0 0.0
  %188 = vmatpush.msra.mxu0 0.0
  %189 = vmatpush.msra.mxu0 0.0
  %190 = vmatpush.msra.mxu0 0.0
  %191 = vmatpush.msra.mxu0 0.0
  %192 = vmatpush.msra.mxu0 0.0
  %193 = vmatpush.msra.mxu0 0.0
  %194 = vmatpush.msra.mxu0 0.0
  %195 = vmatpush.msra.mxu0 0.0
  %196 = vmatpush.msra.mxu0 %v176
  %197 = vmatpush.msra.mxu0 %v175
  %198 = vmatpush.msra.mxu0 %v174
  %199 = vmatpush.msra.mxu0 %v173
  %200 = vmatmul.f32.gmra.mxu0 %v179
  %v201 = vpop.f32.mrf.mxu0
  %v202 = vadd.f32 %v177, %v201
  %203 = vmatmul.f32.gmra.mxu0 %v182
  %v204 = vpop.f32.mrf.mxu0
  %v205 = vadd.f32 %v177, %v204
  %206 = vdwg.mxu0
  %v207 = vld [vmem:[%s1 + $0xe0] sm:$0xff]
  %v208 = vld [vmem:[%s1 + $0xe8] sm:$0xff]
  %v209 = vld [vmem:[%s1 + $0xf0] sm:$0xff]
  %v210 = vld [vmem:[%s1 + $0xf8] sm:$0xff]
  %v211 = vperm.slane %v109, 0
  %212 = vmatpush.msra.mxu0 0.0
  %213 = vmatpush.msra.mxu0 0.0
  %214 = vmatpush.msra.mxu0 0.0
  %215 = vmatpush.msra.mxu0 0.0
  %216 = vmatpush.msra.mxu0 0.0
  %217 = vmatpush.msra.mxu0 0.0
  %218 = vmatpush.msra.mxu0 0.0
  %219 = vmatpush.msra.mxu0 0.0
  %220 = vmatpush.msra.mxu0 0.0
  %221 = vmatpush.msra.mxu0 0.0
  %222 = vmatpush.msra.mxu0 0.0
  %223 = vmatpush.msra.mxu0 0.0
  %224 = vmatpush.msra.mxu0 %v210
  %225 = vmatpush.msra.mxu0 %v209
  %226 = vmatpush.msra.mxu0 %v208
  %227 = vmatpush.msra.mxu0 %v207
  %228 = vmatmul.f32.gmra.mxu0 %v179
  %v229 = vpop.f32.mrf.mxu0
  %v230 = vadd.f32 %v211, %v229
  %231 = vmatmul.f32.gmra.mxu0 %v182
  %v232 = vpop.f32.mrf.mxu0
  %v233 = vadd.f32 %v211, %v232
  %234 = vdwg.mxu0
  %v235 = vld [vmem:[%s1 + $0x100] sm:$0xff]
  %v236 = vld [vmem:[%s1 + $0x108] sm:$0xff]
  %v237 = vld [vmem:[%s1 + $0x110] sm:$0xff]
  %v238 = vld [vmem:[%s1 + $0x118] sm:$0xff]
  %v239 = vperm.slane %v110, 0
  %240 = vmatpush.msra.mxu0 0.0
  %241 = vmatpush.msra.mxu0 0.0
  %242 = vmatpush.msra.mxu0 0.0
  %243 = vmatpush.msra.mxu0 0.0
  %244 = vmatpush.msra.mxu0 0.0
  %245 = vmatpush.msra.mxu0 0.0
  %246 = vmatpush.msra.mxu0 0.0
  %247 = vmatpush.msra.mxu0 0.0
  %248 = vmatpush.msra.mxu0 0.0
  %249 = vmatpush.msra.mxu0 0.0
  %250 = vmatpush.msra.mxu0 0.0
  %251 = vmatpush.msra.mxu0 0.0
  %252 = vmatpush.msra.mxu0 %v238
  %253 = vmatpush.msra.mxu0 %v237
  %254 = vmatpush.msra.mxu0 %v236
  %255 = vmatpush.msra.mxu0 %v235
  %256 = vmatmul.f32.gmra.mxu0 %v179
  %v257 = vpop.f32.mrf.mxu0
  %v258 = vadd.f32 %v239, %v257
  %259 = vmatmul.f32.gmra.mxu0 %v182
  %v260 = vpop.f32.mrf.mxu0
  %v261 = vadd.f32 %v239, %v260
  %262 = vdwg.mxu0
  %vm263 = vcmask 64512
  %v265 = vsel %vm263, %v202, 0
  %v268 = vsel %vm263, %v230, 0
  %270 = vmatpush.xpose.msra.mxu0 0.0
  %271 = vmatpush.xpose.msra.mxu0 0.0
  %272 = vmatpush.xpose.msra.mxu0 0.0
  %273 = vmatpush.xpose.msra.mxu0 0.0
  %274 = vmatpush.xpose.msra.mxu0 0.0
  %275 = vmatpush.xpose.msra.mxu0 0.0
  %276 = vmatpush.xpose.msra.mxu0 0.0
  %277 = vmatpush.xpose.msra.mxu0 0.0
  %278 = vmatpush.xpose.msra.mxu0 0.0
  %279 = vmatpush.xpose.msra.mxu0 0.0
  %280 = vmatpush.xpose.msra.mxu0 0.0
  %281 = vmatpush.xpose.msra.mxu0 0.0
  %282 = vmatpush.xpose.msra.mxu0 0.0
  %283 = vmatpush.xpose.msra.mxu0 0.0
  %284 = vmatpush.xpose.msra.mxu0 0.0
  %285 = vmatpush.xpose.msra.mxu0 %v268
  %286 = vmatmul.f32.gmra.mxu0 %v265
  %v287 = vpop.f32.mrf.mxu0
  %v288 = vadd.f32 %v105, %v287
  %289 = vdwg.mxu0
  %v291 = vsel %vm263, %v205, 0
  %v294 = vsel %vm263, %v233, 0
  %296 = vmatpush.xpose.msra.mxu0 0.0
  %297 = vmatpush.xpose.msra.mxu0 0.0
  %298 = vmatpush.xpose.msra.mxu0 0.0
  %299 = vmatpush.xpose.msra.mxu0 0.0
  %300 = vmatpush.xpose.msra.mxu0 0.0
  %301 = vmatpush.xpose.msra.mxu0 0.0
  %302 = vmatpush.xpose.msra.mxu0 0.0
  %303 = vmatpush.xpose.msra.mxu0 0.0
  %304 = vmatpush.xpose.msra.mxu0 0.0
  %305 = vmatpush.xpose.msra.mxu0 0.0
  %306 = vmatpush.xpose.msra.mxu0 0.0
  %307 = vmatpush.xpose.msra.mxu0 0.0
  %308 = vmatpush.xpose.msra.mxu0 0.0
  %309 = vmatpush.xpose.msra.mxu0 0.0
  %310 = vmatpush.xpose.msra.mxu0 0.0
  %311 = vmatpush.xpose.msra.mxu0 %v294
  %312 = vmatmul.f32.gmra.mxu0 %v291
  %v313 = vpop.f32.mrf.mxu0
  %v314 = vadd.f32 %v105, %v313
  %315 = vdwg.mxu0
  %v316 = vsel %vm263, %v288, -inf
  %317 = vmax.xlane.f32.xlu0 %v316
  %v318 = vpop.xlane.xlu0 %317
  %v319 = vsel %vm263, %v314, -inf
  %320 = vmax.xlane.f32.xlu0 %v319
  %v321 = vpop.xlane.xlu0 %320
  %v322 = vsub.f32 %v288, %v318
  %v323 = vsub.f32 %v314, %v321
  %v324 = vmul.f32 %v322, 1.442695
  %v325 = vpow.pop %v324
  %v326 = vmul.f32 %v323, 1.442695
  %v327 = vpow.pop %v326
  %v328 = vsel %vm263, %v325, 0.0
  %329 = vadd.xlane.f32.xlu0 %v328
  %v330 = vpop.xlane.xlu0 %329
  %v331 = vsel %vm263, %v327, 0.0
  %332 = vadd.xlane.f32.xlu0 %v331
  %v333 = vpop.xlane.xlu0 %332
  %v334 = vrcp.pop %v330
  %v335 = vrcp.pop %v333
  %v336 = vmul.f32 %v325, %v334
  %v337 = vmul.f32 %v327, %v335
  %v339 = vsel %vm263, %v336, 0
  %341 = vmatpush.msra.mxu0 0.0
  %342 = vmatpush.msra.mxu0 0.0
  %343 = vmatpush.msra.mxu0 0.0
  %344 = vmatpush.msra.mxu0 0.0
  %345 = vmatpush.msra.mxu0 0.0
  %346 = vmatpush.msra.mxu0 0.0
  %347 = vmatpush.msra.mxu0 0.0
  %348 = vmatpush.msra.mxu0 0.0
  %349 = vmatpush.msra.mxu0 0.0
  %350 = vmatpush.msra.mxu0 0.0
  %351 = vmatpush.msra.mxu0 0.0
  %352 = vmatpush.msra.mxu0 0.0
  %353 = vmatpush.msra.mxu0 0.0
  %354 = vmatpush.msra.mxu0 0.0
  %355 = vmatpush.msra.mxu0 0.0
  %356 = vmatpush.msra.mxu0 %v258
  %357 = vmatmul.f32.gmra.mxu0 %v339
  %v358 = vpop.f32.mrf.mxu0
  %v359 = vadd.f32 0.0, %v358
  %360 = vdwg.mxu0
  %v362 = vsel %vm263, %v337, 0
  %364 = vmatpush.msra.mxu0 0.0
  %365 = vmatpush.msra.mxu0 0.0
  %366 = vmatpush.msra.mxu0 0.0
  %367 = vmatpush.msra.mxu0 0.0
  %368 = vmatpush.msra.mxu0 0.0
  %369 = vmatpush.msra.mxu0 0.0
  %370 = vmatpush.msra.mxu0 0.0
  %371 = vmatpush.msra.mxu0 0.0
  %372 = vmatpush.msra.mxu0 0.0
  %373 = vmatpush.msra.mxu0 0.0
  %374 = vmatpush.msra.mxu0 0.0
  %375 = vmatpush.msra.mxu0 0.0
  %376 = vmatpush.msra.mxu0 0.0
  %377 = vmatpush.msra.mxu0 0.0
  %378 = vmatpush.msra.mxu0 0.0
  %379 = vmatpush.msra.mxu0 %v261
  %380 = vmatmul.f32.gmra.mxu0 %v362
  %v381 = vpop.f32.mrf.mxu0
  %v382 = vadd.f32 0.0, %v381
  %383 = vdwg.mxu0
  %384 = vrot.lane.b32.xlu0 %v202, 120
  %v385 = vpop.permute.xlu0 %384
  %386 = vrot.lane.b32.xlu0 %v230, 120
  %v387 = vpop.permute.xlu0 %386
  %v388 = vsel %vm263, %v385, 0
  %v390 = vsel %vm263, %v387, 0
  %392 = vmatpush.xpose.msra.mxu0 0.0
  %393 = vmatpush.xpose.msra.mxu0 0.0
  %394 = vmatpush.xpose.msra.mxu0 0.0
  %395 = vmatpush.xpose.msra.mxu0 0.0
  %396 = vmatpush.xpose.msra.mxu0 0.0
  %397 = vmatpush.xpose.msra.mxu0 0.0
  %398 = vmatpush.xpose.msra.mxu0 0.0
  %399 = vmatpush.xpose.msra.mxu0 0.0
  %400 = vmatpush.xpose.msra.mxu0 0.0
  %401 = vmatpush.xpose.msra.mxu0 0.0
  %402 = vmatpush.xpose.msra.mxu0 0.0
  %403 = vmatpush.xpose.msra.mxu0 0.0
  %404 = vmatpush.xpose.msra.mxu0 0.0
  %405 = vmatpush.xpose.msra.mxu0 0.0
  %406 = vmatpush.xpose.msra.mxu0 0.0
  %407 = vmatpush.xpose.msra.mxu0 %v390
  %408 = vmatmul.f32.gmra.mxu0 %v388
  %v409 = vpop.f32.mrf.mxu0
  %v410 = vadd.f32 %v105, %v409
  %411 = vdwg.mxu0
  %412 = vrot.lane.b32.xlu0 %v205, 120
  %v413 = vpop.permute.xlu0 %412
  %414 = vrot.lane.b32.xlu0 %v233, 120
  %v415 = vpop.permute.xlu0 %414
  %v416 = vsel %vm263, %v413, 0
  %v418 = vsel %vm263, %v415, 0
  %420 = vmatpush.xpose.msra.mxu0 0.0
  %421 = vmatpush.xpose.msra.mxu0 0.0
  %422 = vmatpush.xpose.msra.mxu0 0.0
  %423 = vmatpush.xpose.msra.mxu0 0.0
  %424 = vmatpush.xpose.msra.mxu0 0.0
  %425 = vmatpush.xpose.msra.mxu0 0.0
  %426 = vmatpush.xpose.msra.mxu0 0.0
  %427 = vmatpush.xpose.msra.mxu0 0.0
  %428 = vmatpush.xpose.msra.mxu0 0.0
  %429 = vmatpush.xpose.msra.mxu0 0.0
  %430 = vmatpush.xpose.msra.mxu0 0.0
  %431 = vmatpush.xpose.msra.mxu0 0.0
  %432 = vmatpush.xpose.msra.mxu0 0.0
  %433 = vmatpush.xpose.msra.mxu0 0.0
  %434 = vmatpush.xpose.msra.mxu0 0.0
  %435 = vmatpush.xpose.msra.mxu0 %v418
  %436 = vmatmul.f32.gmra.mxu0 %v416
  %v437 = vpop.f32.mrf.mxu0
  %v438 = vadd.f32 %v105, %v437
  %439 = vdwg.mxu0
  %v440 = vsel %vm263, %v410, -inf
  %441 = vmax.xlane.f32.xlu0 %v440
  %v442 = vpop.xlane.xlu0 %441
  %v443 = vsel %vm263, %v438, -inf
  %444 = vmax.xlane.f32.xlu0 %v443
  %v445 = vpop.xlane.xlu0 %444
  %v446 = vsub.f32 %v410, %v442
  %v447 = vsub.f32 %v438, %v445
  %v448 = vmul.f32 %v446, 1.442695
  %v449 = vpow.pop %v448
  %v450 = vmul.f32 %v447, 1.442695
  %v451 = vpow.pop %v450
  %v452 = vsel %vm263, %v449, 0.0
  %453 = vadd.xlane.f32.xlu0 %v452
  %v454 = vpop.xlane.xlu0 %453
  %v455 = vsel %vm263, %v451, 0.0
  %456 = vadd.xlane.f32.xlu0 %v455
  %v457 = vpop.xlane.xlu0 %456
  %v458 = vrcp.pop %v454
  %v459 = vrcp.pop %v457
  %v460 = vmul.f32 %v449, %v458
  %v461 = vmul.f32 %v451, %v459
  %463 = vrot.lane.b32.xlu0 %v258, 120
  %v464 = vpop.permute.xlu0 %463
  %v467 = vsel %vm263, %v460, 0
  %469 = vmatpush.msra.mxu0 0.0
  %470 = vmatpush.msra.mxu0 0.0
  %471 = vmatpush.msra.mxu0 0.0
  %472 = vmatpush.msra.mxu0 0.0
  %473 = vmatpush.msra.mxu0 0.0
  %474 = vmatpush.msra.mxu0 0.0
  %475 = vmatpush.msra.mxu0 0.0
  %476 = vmatpush.msra.mxu0 0.0
  %477 = vmatpush.msra.mxu0 0.0
  %478 = vmatpush.msra.mxu0 0.0
  %479 = vmatpush.msra.mxu0 0.0
  %480 = vmatpush.msra.mxu0 0.0
  %481 = vmatpush.msra.mxu0 0.0
  %482 = vmatpush.msra.mxu0 0.0
  %483 = vmatpush.msra.mxu0 0.0
  %484 = vmatpush.msra.mxu0 %v464
  %485 = vmatmul.f32.gmra.mxu0 %v467
  %v486 = vpop.f32.mrf.mxu0
  %v487 = vadd.f32 0.0, %v486
  %488 = vdwg.mxu0
  %490 = vrot.lane.b32.xlu0 %v261, 120
  %v491 = vpop.permute.xlu0 %490
  %v494 = vsel %vm263, %v461, 0
  %496 = vmatpush.msra.mxu0 0.0
  %497 = vmatpush.msra.mxu0 0.0
  %498 = vmatpush.msra.mxu0 0.0
  %499 = vmatpush.msra.mxu0 0.0
  %500 = vmatpush.msra.mxu0 0.0
  %501 = vmatpush.msra.mxu0 0.0
  %502 = vmatpush.msra.mxu0 0.0
  %503 = vmatpush.msra.mxu0 0.0
  %504 = vmatpush.msra.mxu0 0.0
  %505 = vmatpush.msra.mxu0 0.0
  %506 = vmatpush.msra.mxu0 0.0
  %507 = vmatpush.msra.mxu0 0.0
  %508 = vmatpush.msra.mxu0 0.0
  %509 = vmatpush.msra.mxu0 0.0
  %510 = vmatpush.msra.mxu0 0.0
  %511 = vmatpush.msra.mxu0 %v491
  %512 = vmatmul.f32.gmra.mxu0 %v494
  %v513 = vpop.f32.mrf.mxu0
  %v514 = vadd.f32 0.0, %v513
  %515 = vdwg.mxu0
  %516 = vrot.lane.b32.xlu0 %v202, 112
  %v517 = vpop.permute.xlu0 %516
  %518 = vrot.lane.b32.xlu0 %v230, 112
  %v519 = vpop.permute.xlu0 %518
  %v520 = vsel %vm263, %v517, 0
  %v522 = vsel %vm263, %v519, 0
  %524 = vmatpush.xpose.msra.mxu0 0.0
  %525 = vmatpush.xpose.msra.mxu0 0.0
  %526 = vmatpush.xpose.msra.mxu0 0.0
  %527 = vmatpush.xpose.msra.mxu0 0.0
  %528 = vmatpush.xpose.msra.mxu0 0.0
  %529 = vmatpush.xpose.msra.mxu0 0.0
  %530 = vmatpush.xpose.msra.mxu0 0.0
  %531 = vmatpush.xpose.msra.mxu0 0.0
  %532 = vmatpush.xpose.msra.mxu0 0.0
  %533 = vmatpush.xpose.msra.mxu0 0.0
  %534 = vmatpush.xpose.msra.mxu0 0.0
  %535 = vmatpush.xpose.msra.mxu0 0.0
  %536 = vmatpush.xpose.msra.mxu0 0.0
  %537 = vmatpush.xpose.msra.mxu0 0.0
  %538 = vmatpush.xpose.msra.mxu0 0.0
  %539 = vmatpush.xpose.msra.mxu0 %v522
  %540 = vmatmul.f32.gmra.mxu0 %v520
  %v541 = vpop.f32.mrf.mxu0
  %v542 = vadd.f32 %v105, %v541
  %543 = vdwg.mxu0
  %544 = vrot.lane.b32.xlu0 %v205, 112
  %v545 = vpop.permute.xlu0 %544
  %546 = vrot.lane.b32.xlu0 %v233, 112
  %v547 = vpop.permute.xlu0 %546
  %v548 = vsel %vm263, %v545, 0
  %v550 = vsel %vm263, %v547, 0
  %552 = vmatpush.xpose.msra.mxu0 0.0
  %553 = vmatpush.xpose.msra.mxu0 0.0
  %554 = vmatpush.xpose.msra.mxu0 0.0
  %555 = vmatpush.xpose.msra.mxu0 0.0
  %556 = vmatpush.xpose.msra.mxu0 0.0
  %557 = vmatpush.xpose.msra.mxu0 0.0
  %558 = vmatpush.xpose.msra.mxu0 0.0
  %559 = vmatpush.xpose.msra.mxu0 0.0
  %560 = vmatpush.xpose.msra.mxu0 0.0
  %561 = vmatpush.xpose.msra.mxu0 0.0
  %562 = vmatpush.xpose.msra.mxu0 0.0
  %563 = vmatpush.xpose.msra.mxu0 0.0
  %564 = vmatpush.xpose.msra.mxu0 0.0
  %565 = vmatpush.xpose.msra.mxu0 0.0
  %566 = vmatpush.xpose.msra.mxu0 0.0
  %567 = vmatpush.xpose.msra.mxu0 %v550
  %568 = vmatmul.f32.gmra.mxu0 %v548
  %v569 = vpop.f32.mrf.mxu0
  %v570 = vadd.f32 %v105, %v569
  %571 = vdwg.mxu0
  %v572 = vsel %vm263, %v542, -inf
  %573 = vmax.xlane.f32.xlu0 %v572
  %v574 = vpop.xlane.xlu0 %573
  %v575 = vsel %vm263, %v570, -inf
  %576 = vmax.xlane.f32.xlu0 %v575
  %v577 = vpop.xlane.xlu0 %576
  %v578 = vsub.f32 %v542, %v574
  %v579 = vsub.f32 %v570, %v577
  %v580 = vmul.f32 %v578, 1.442695
  %v581 = vpow.pop %v580
  %v582 = vmul.f32 %v579, 1.442695
  %v583 = vpow.pop %v582
  %v584 = vsel %vm263, %v581, 0.0
  %585 = vadd.xlane.f32.xlu0 %v584
  %v586 = vpop.xlane.xlu0 %585
  %v587 = vsel %vm263, %v583, 0.0
  %588 = vadd.xlane.f32.xlu0 %v587
  %v589 = vpop.xlane.xlu0 %588
  %v590 = vrcp.pop %v586
  %v591 = vrcp.pop %v589
  %v592 = vmul.f32 %v581, %v590
  %v593 = vmul.f32 %v583, %v591
  %594 = vrot.lane.b32.xlu0 %v258, 112
  %v595 = vpop.permute.xlu0 %594
  %v598 = vsel %vm263, %v592, 0
  %600 = vmatpush.msra.mxu0 0.0
  %601 = vmatpush.msra.mxu0 0.0
  %602 = vmatpush.msra.mxu0 0.0
  %603 = vmatpush.msra.mxu0 0.0
  %604 = vmatpush.msra.mxu0 0.0
  %605 = vmatpush.msra.mxu0 0.0
  %606 = vmatpush.msra.mxu0 0.0
  %607 = vmatpush.msra.mxu0 0.0
  %608 = vmatpush.msra.mxu0 0.0
  %609 = vmatpush.msra.mxu0 0.0
  %610 = vmatpush.msra.mxu0 0.0
  %611 = vmatpush.msra.mxu0 0.0
  %612 = vmatpush.msra.mxu0 0.0
  %613 = vmatpush.msra.mxu0 0.0
  %614 = vmatpush.msra.mxu0 0.0
  %615 = vmatpush.msra.mxu0 %v595
  %616 = vmatmul.f32.gmra.mxu0 %v598
  %v617 = vpop.f32.mrf.mxu0
  %v618 = vadd.f32 0.0, %v617
  %619 = vdwg.mxu0
  %620 = vrot.lane.b32.xlu0 %v261, 112
  %v621 = vpop.permute.xlu0 %620
  %v624 = vsel %vm263, %v593, 0
  %626 = vmatpush.msra.mxu0 0.0
  %627 = vmatpush.msra.mxu0 0.0
  %628 = vmatpush.msra.mxu0 0.0
  %629 = vmatpush.msra.mxu0 0.0
  %630 = vmatpush.msra.mxu0 0.0
  %631 = vmatpush.msra.mxu0 0.0
  %632 = vmatpush.msra.mxu0 0.0
  %633 = vmatpush.msra.mxu0 0.0
  %634 = vmatpush.msra.mxu0 0.0
  %635 = vmatpush.msra.mxu0 0.0
  %636 = vmatpush.msra.mxu0 0.0
  %637 = vmatpush.msra.mxu0 0.0
  %638 = vmatpush.msra.mxu0 0.0
  %639 = vmatpush.msra.mxu0 0.0
  %640 = vmatpush.msra.mxu0 0.0
  %641 = vmatpush.msra.mxu0 %v621
  %642 = vmatmul.f32.gmra.mxu0 %v624
  %v643 = vpop.f32.mrf.mxu0
  %v644 = vadd.f32 0.0, %v643
  %645 = vdwg.mxu0
  %646 = vrot.lane.b32.xlu0 %v202, 104
  %v647 = vpop.permute.xlu0 %646
  %648 = vrot.lane.b32.xlu0 %v230, 104
  %v649 = vpop.permute.xlu0 %648
  %v650 = vsel %vm263, %v647, 0
  %v652 = vsel %vm263, %v649, 0
  %654 = vmatpush.xpose.msra.mxu0 0.0
  %655 = vmatpush.xpose.msra.mxu0 0.0
  %656 = vmatpush.xpose.msra.mxu0 0.0
  %657 = vmatpush.xpose.msra.mxu0 0.0
  %658 = vmatpush.xpose.msra.mxu0 0.0
  %659 = vmatpush.xpose.msra.mxu0 0.0
  %660 = vmatpush.xpose.msra.mxu0 0.0
  %661 = vmatpush.xpose.msra.mxu0 0.0
  %662 = vmatpush.xpose.msra.mxu0 0.0
  %663 = vmatpush.xpose.msra.mxu0 0.0
  %664 = vmatpush.xpose.msra.mxu0 0.0
  %665 = vmatpush.xpose.msra.mxu0 0.0
  %666 = vmatpush.xpose.msra.mxu0 0.0
  %667 = vmatpush.xpose.msra.mxu0 0.0
  %668 = vmatpush.xpose.msra.mxu0 0.0
  %669 = vmatpush.xpose.msra.mxu0 %v652
  %670 = vmatmul.f32.gmra.mxu0 %v650
  %v671 = vpop.f32.mrf.mxu0
  %v672 = vadd.f32 %v105, %v671
  %673 = vdwg.mxu0
  %674 = vrot.lane.b32.xlu0 %v205, 104
  %v675 = vpop.permute.xlu0 %674
  %676 = vrot.lane.b32.xlu0 %v233, 104
  %v677 = vpop.permute.xlu0 %676
  %v678 = vsel %vm263, %v675, 0
  %v680 = vsel %vm263, %v677, 0
  %682 = vmatpush.xpose.msra.mxu0 0.0
  %683 = vmatpush.xpose.msra.mxu0 0.0
  %684 = vmatpush.xpose.msra.mxu0 0.0
  %685 = vmatpush.xpose.msra.mxu0 0.0
  %686 = vmatpush.xpose.msra.mxu0 0.0
  %687 = vmatpush.xpose.msra.mxu0 0.0
  %688 = vmatpush.xpose.msra.mxu0 0.0
  %689 = vmatpush.xpose.msra.mxu0 0.0
  %690 = vmatpush.xpose.msra.mxu0 0.0
  %691 = vmatpush.xpose.msra.mxu0 0.0
  %692 = vmatpush.xpose.msra.mxu0 0.0
  %693 = vmatpush.xpose.msra.mxu0 0.0
  %694 = vmatpush.xpose.msra.mxu0 0.0
  %695 = vmatpush.xpose.msra.mxu0 0.0
  %696 = vmatpush.xpose.msra.mxu0 0.0
  %697 = vmatpush.xpose.msra.mxu0 %v680
  %698 = vmatmul.f32.gmra.mxu0 %v678
  %v699 = vpop.f32.mrf.mxu0
  %v700 = vadd.f32 %v105, %v699
  %701 = vdwg.mxu0
  %v702 = vsel %vm263, %v672, -inf
  %703 = vmax.xlane.f32.xlu0 %v702
  %v704 = vpop.xlane.xlu0 %703
  %v705 = vsel %vm263, %v700, -inf
  %706 = vmax.xlane.f32.xlu0 %v705
  %v707 = vpop.xlane.xlu0 %706
  %v708 = vsub.f32 %v672, %v704
  %v709 = vsub.f32 %v700, %v707
  %v710 = vmul.f32 %v708, 1.442695
  %v711 = vpow.pop %v710
  %v712 = vmul.f32 %v709, 1.442695
  %v713 = vpow.pop %v712
  %v714 = vsel %vm263, %v711, 0.0
  %715 = vadd.xlane.f32.xlu0 %v714
  %v716 = vpop.xlane.xlu0 %715
  %v717 = vsel %vm263, %v713, 0.0
  %718 = vadd.xlane.f32.xlu0 %v717
  %v719 = vpop.xlane.xlu0 %718
  %v720 = vrcp.pop %v716
  %v721 = vrcp.pop %v719
  %v722 = vmul.f32 %v711, %v720
  %v723 = vmul.f32 %v713, %v721
  %724 = vrot.lane.b32.xlu0 %v258, 104
  %v725 = vpop.permute.xlu0 %724
  %v728 = vsel %vm263, %v722, 0
  %730 = vmatpush.msra.mxu0 0.0
  %731 = vmatpush.msra.mxu0 0.0
  %732 = vmatpush.msra.mxu0 0.0
  %733 = vmatpush.msra.mxu0 0.0
  %734 = vmatpush.msra.mxu0 0.0
  %735 = vmatpush.msra.mxu0 0.0
  %736 = vmatpush.msra.mxu0 0.0
  %737 = vmatpush.msra.mxu0 0.0
  %738 = vmatpush.msra.mxu0 0.0
  %739 = vmatpush.msra.mxu0 0.0
  %740 = vmatpush.msra.mxu0 0.0
  %741 = vmatpush.msra.mxu0 0.0
  %742 = vmatpush.msra.mxu0 0.0
  %743 = vmatpush.msra.mxu0 0.0
  %744 = vmatpush.msra.mxu0 0.0
  %745 = vmatpush.msra.mxu0 %v725
  %746 = vmatmul.f32.gmra.mxu0 %v728
  %v747 = vpop.f32.mrf.mxu0
  %v748 = vadd.f32 0.0, %v747
  %749 = vdwg.mxu0
  %750 = vrot.lane.b32.xlu0 %v261, 104
  %v751 = vpop.permute.xlu0 %750
  %v754 = vsel %vm263, %v723, 0
  %756 = vmatpush.msra.mxu0 0.0
  %757 = vmatpush.msra.mxu0 0.0
  %758 = vmatpush.msra.mxu0 0.0
  %759 = vmatpush.msra.mxu0 0.0
  %760 = vmatpush.msra.mxu0 0.0
  %761 = vmatpush.msra.mxu0 0.0
  %762 = vmatpush.msra.mxu0 0.0
  %763 = vmatpush.msra.mxu0 0.0
  %764 = vmatpush.msra.mxu0 0.0
  %765 = vmatpush.msra.mxu0 0.0
  %766 = vmatpush.msra.mxu0 0.0
  %767 = vmatpush.msra.mxu0 0.0
  %768 = vmatpush.msra.mxu0 0.0
  %769 = vmatpush.msra.mxu0 0.0
  %770 = vmatpush.msra.mxu0 0.0
  %771 = vmatpush.msra.mxu0 %v751
  %772 = vmatmul.f32.gmra.mxu0 %v754
  %v773 = vpop.f32.mrf.mxu0
  %v774 = vadd.f32 0.0, %v773
  %775 = vdwg.mxu0
  %778 = vrot.lane.b32.xlu0 %v487, 8
  %v779 = vpop.permute.xlu0 %778
  %780 = vrot.lane.b32.xlu0 %v514, 8
  %v781 = vpop.permute.xlu0 %780
  %786 = vrot.lane.b32.xlu0 %v618, 16
  %v787 = vpop.permute.xlu0 %786
  %788 = vrot.lane.b32.xlu0 %v644, 16
  %v789 = vpop.permute.xlu0 %788
  %794 = vrot.lane.b32.xlu0 %v748, 24
  %v795 = vpop.permute.xlu0 %794
  %796 = vrot.lane.b32.xlu0 %v774, 24
  %v797 = vpop.permute.xlu0 %796
  %v800 = vsel %vm263, %v359, %v779
  %v801 = vsel %vm263, %v382, %v781
  %vm802 = vcmask 130048
  %v803 = vsel %vm802, %v800, %v787
  %v804 = vsel %vm802, %v801, %v789
  %vm805 = vcmask 195584
  %v806 = vsel %vm805, %v803, %v795
  %v807 = vsel %vm805, %v804, %v797
  %v808 = vld [vmem:[%s1 + $0x120] sm:$0xff]
  %v809 = vld [vmem:[%s1 + $0x128] sm:$0xff]
  %v810 = vld [vmem:[%s1 + $0x130] sm:$0xff]
  %v811 = vld [vmem:[%s1 + $0x138] sm:$0xff]
  %v812 = vperm.slane %v111, 0
  %v814 = vsel %vm115, %v806, 0
  %v817 = vsel %vm115, %v807, 0
  %819 = vmatpush.msra.mxu0 0.0
  %820 = vmatpush.msra.mxu0 0.0
  %821 = vmatpush.msra.mxu0 0.0
  %822 = vmatpush.msra.mxu0 0.0
  %823 = vmatpush.msra.mxu0 0.0
  %824 = vmatpush.msra.mxu0 0.0
  %825 = vmatpush.msra.mxu0 0.0
  %826 = vmatpush.msra.mxu0 0.0
  %827 = vmatpush.msra.mxu0 0.0
  %828 = vmatpush.msra.mxu0 0.0
  %829 = vmatpush.msra.mxu0 0.0
  %830 = vmatpush.msra.mxu0 0.0
  %831 = vmatpush.msra.mxu0 %v811
  %832 = vmatpush.msra.mxu0 %v810
  %833 = vmatpush.msra.mxu0 %v809
  %834 = vmatpush.msra.mxu0 %v808
  %835 = vmatmul.f32.gmra.mxu0 %v814
  %v836 = vpop.f32.mrf.mxu0
  %v837 = vadd.f32 %v812, %v836
  %838 = vmatmul.f32.gmra.mxu0 %v817
  %v839 = vpop.f32.mrf.mxu0
  %v840 = vadd.f32 %v812, %v839
  %841 = vdwg.mxu0
  %v842 = vadd.f32 %v97, %v837
  %v843 = vadd.f32 %v100, %v840
  %v844 = vsel %vm115, %v842, 0.0
  %845 = vadd.xlane.f32.xlu0 %v844
  %v846 = vpop.xlane.xlu0 %845
  %v847 = vsel %vm115, %v843, 0.0
  %848 = vadd.xlane.f32.xlu0 %v847
  %v849 = vpop.xlane.xlu0 %848
  %v850 = vmul.f32 %v846, %v128
  %v851 = vmul.f32 %v849, %v128
  %v852 = vsub.f32 %v842, %v850
  %v853 = vsub.f32 %v843, %v851
  %v854 = vmul.f32 %v852, %v852
  %v855 = vmul.f32 %v853, %v853
  %v856 = vsel %vm115, %v854, 0.0
  %857 = vadd.xlane.f32.xlu0 %v856
  %v858 = vpop.xlane.xlu0 %857
  %v859 = vsel %vm115, %v855, 0.0
  %860 = vadd.xlane.f32.xlu0 %v859
  %v861 = vpop.xlane.xlu0 %860
  %v862 = vmul.f32 %v858, %v128
  %v863 = vmul.f32 %v861, %v128
  %v864 = vadd.f32 %v862, 1e-12
  %v865 = vadd.f32 %v863, 1e-12
  %v866 = vrsqrt.pop %v864
  %v867 = vmul.f32 %v866, %v864
  %v868 = vmul.f32 %v867, %v866
  %v869 = vmul.f32 0.5, %v868
  %v870 = vsub.f32 1.5, %v869
  %v871 = vmul.f32 %v866, %v870
  %vm872 = vweird.f32 %v864
  %vm873 = vweird.f32 %v866
  %vm874 = vmor %vm872, %vm873
  %v875 = vsel %vm874, %v866, %v871
  %v876 = vrsqrt.pop %v865
  %v877 = vmul.f32 %v876, %v865
  %v878 = vmul.f32 %v877, %v876
  %v879 = vmul.f32 0.5, %v878
  %v880 = vsub.f32 1.5, %v879
  %v881 = vmul.f32 %v876, %v880
  %vm882 = vweird.f32 %v865
  %vm883 = vweird.f32 %v876
  %vm884 = vmor %vm882, %vm883
  %v885 = vsel %vm884, %v876, %v881
  %v886 = vmul.f32 %v852, %v875
  %v887 = vmul.f32 %v853, %v885
  %v888 = vperm.slane %v112, 0
  %v889 = vmul.f32 %v886, %v888
  %v890 = vmul.f32 %v887, %v888
  %v891 = vperm.slane %v113, 0
  %v892 = vadd.f32 %v889, %v891
  %v893 = vadd.f32 %v890, %v891
  %v894 = vld [vmem:[%s2] sm:$0xff]
  %v895 = vld [vmem:[%s2 + $0x8] sm:$0xff]
  %v896 = vld [vmem:[%s2 + $0x10] sm:$0xff]
  %v897 = vld [vmem:[%s2 + $0x18] sm:$0xff]
  %v898 = vld [vmem:[%s2 + $0x40] sm:$0x1]
  %v899 = vperm.slane %v898, 0
  %v901 = vsel %vm115, %v892, 0
  %v904 = vsel %vm115, %v893, 0
  %906 = vmatpush.msra.mxu0 0.0
  %907 = vmatpush.msra.mxu0 0.0
  %908 = vmatpush.msra.mxu0 0.0
  %909 = vmatpush.msra.mxu0 0.0
  %910 = vmatpush.msra.mxu0 0.0
  %911 = vmatpush.msra.mxu0 0.0
  %912 = vmatpush.msra.mxu0 0.0
  %913 = vmatpush.msra.mxu0 0.0
  %914 = vmatpush.msra.mxu0 0.0
  %915 = vmatpush.msra.mxu0 0.0
  %916 = vmatpush.msra.mxu0 0.0
  %917 = vmatpush.msra.mxu0 0.0
  %918 = vmatpush.msra.mxu0 %v897
  %919 = vmatpush.msra.mxu0 %v896
  %920 = vmatpush.msra.mxu0 %v895
  %921 = vmatpush.msra.mxu0 %v894
  %922 = vmatmul.f32.gmra.mxu0 %v901
  %v923 = vpop.f32.mrf.mxu0
  %v924 = vadd.f32 %v899, %v923
  %925 = vmatmul.f32.gmra.mxu0 %v904
  %v926 = vpop.f32.mrf.mxu0
  %v927 = vadd.f32 %v899, %v926
  %928 = vdwg.mxu0
  %v929 = vmul.f32 %v924, %v924
  %v930 = vmul.f32 %v927, %v927
  %v931 = vmul.f32 %v924, %v929
  %v932 = vmul.f32 %v927, %v930
  %v933 = vmul.f32 %v931, 0.044715
  %v934 = vmul.f32 %v932, 0.044715
  %v935 = vadd.f32 %v924, %v933
  %v936 = vadd.f32 %v927, %v934
  %v937 = vmul.f32 %v935, 0.7978846
  %v938 = vmul.f32 %v936, 0.7978846
  %v939 = vtanh.pop %v937
  %v940 = vtanh.pop %v938
  %v941 = vadd.f32 %v939, 1.0
  %v942 = vadd.f32 %v940, 1.0
  %v943 = vmul.f32 %v941, 0.5
  %v944 = vmul.f32 %v942, 0.5
  %v945 = vmul.f32 %v924, %v943
  %v946 = vmul.f32 %v927, %v944
  %v947 = vld [vmem:[%s1 + $0x140] sm:$0xff]
  %v948 = vld [vmem:[%s1 + $0x148] sm:$0xff]
  %v949 = vld [vmem:[%s1 + $0x150] sm:$0xff]
  %v950 = vld [vmem:[%s1 + $0x158] sm:$0xff]
  %v951 = vld [vmem:[%s1 + $0x160] sm:$0xff]
  %v952 = vld [vmem:[%s1 + $0x168] sm:$0xff]
  %v953 = vld [vmem:[%s1 + $0x170] sm:$0xff]
  %v954 = vld [vmem:[%s1 + $0x178] sm:$0xff]
  %v955 = vperm.slane %v114, 0
  %v957 = vsel %vm49, %v945, 0
  %v960 = vsel %vm49, %v946, 0
  %962 = vmatpush.msra.mxu0 0.0
  %963 = vmatpush.msra.mxu0 0.0
  %964 = vmatpush.msra.mxu0 0.0
  %965 = vmatpush.msra.mxu0 0.0
  %966 = vmatpush.msra.mxu0 0.0
  %967 = vmatpush.msra.mxu0 0.0
  %968 = vmatpush.msra.mxu0 0.0
  %969 = vmatpush.msra.mxu0 0.0
  %970 = vmatpush.msra.mxu0 %v954
  %971 = vmatpush.msra.mxu0 %v953
  %972 = vmatpush.msra.mxu0 %v952
  %973 = vmatpush.msra.mxu0 %v951
  %974 = vmatpush.msra.mxu0 %v950
  %975 = vmatpush.msra.mxu0 %v949
  %976 = vmatpush.msra.mxu0 %v948
  %977 = vmatpush.msra.mxu0 %v947
  %978 = vmatmul.f32.gmra.mxu0 %v957
  %v979 = vpop.f32.mrf.mxu0
  %v980 = vadd.f32 %v955, %v979
  %981 = vmatmul.f32.gmra.mxu0 %v960
  %v982 = vpop.f32.mrf.mxu0
  %v983 = vadd.f32 %v955, %v982
  %984 = vdwg.mxu0
  %v985 = vadd.f32 %v842, %v980
  %v986 = vadd.f32 %v843, %v983
  %v987 = vld [vmem:[%s3 + $0x11] sm:$0x1]
  %v988 = vld [vmem:[%s3 + $0x12] sm:$0x1]
  %v989 = vld [vmem:[%s3 + $0x13] sm:$0x1]
  %v990 = vld [vmem:[%s3 + $0x14] sm:$0x1]
  %v991 = vld [vmem:[%s3 + $0x15] sm:$0x1]
  %v992 = vld [vmem:[%s3 + $0x16] sm:$0x1]
  %v993 = vld [vmem:[%s3 + $0x17] sm:$0x1]
  %v994 = vld [vmem:[%s3 + $0x18] sm:$0x1]
  %v995 = vld [vmem:[%s3 + $0x19] sm:$0x1]
  %v996 = vsel %vm115, %v985, 0.0
  %997 = vadd.xlane.f32.xlu0 %v996
  %v998 = vpop.xlane.xlu0 %997
  %v999 = vsel %vm115, %v986, 0.0
  %1000 = vadd.xlane.f32.xlu0 %v999
  %v1001 = vpop.xlane.xlu0 %1000
  %v1002 = vmul.f32 %v998, %v128
  %v1003 = vmul.f32 %v1001, %v128
  %v1004 = vsub.f32 %v985, %v1002
  %v1005 = vsub.f32 %v986, %v1003
  %v1006 = vmul.f32 %v1004, %v1004
  %v1007 = vmul.f32 %v1005, %v1005
  %v1008 = vsel %vm115, %v1006, 0.0
  %1009 = vadd.xlane.f32.xlu0 %v1008
  %v1010 = vpop.xlane.xlu0 %1009
  %v1011 = vsel %vm115, %v1007, 0.0
  %1012 = vadd.xlane.f32.xlu0 %v1011
  %v1013 = vpop.xlane.xlu0 %1012
  %v1014 = vmul.f32 %v1010, %v128
  %v1015 = vmul.f32 %v1013, %v128
  %v1016 = vadd.f32 %v1014, 1e-12
  %v1017 = vadd.f32 %v1015, 1e-12
  %v1018 = vrsqrt.pop %v1016
  %v1019 = vmul.f32 %v1018, %v1016
  %v1020 = vmul.f32 %v1019, %v1018
  %v1021 = vmul.f32 0.5, %v1020
  %v1022 = vsub.f32 1.5, %v1021
  %v1023 = vmul.f32 %v1018, %v1022
  %vm1024 = vweird.f32 %v1016
  %vm1025 = vweird.f32 %v1018
  %vm1026 = vmor %vm1024, %vm1025
  %v1027 = vsel %vm1026, %v1018, %v1023
  %v1028 = vrsqrt.pop %v1017
  %v1029 = vmul.f32 %v1028, %v1017
  %v1030 = vmul.f32 %v1029, %v1028
  %v1031 = vmul.f32 0.5, %v1030
  %v1032 = vsub.f32 1.5, %v1031
  %v1033 = vmul.f32 %v1028, %v1032
  %vm1034 = vweird.f32 %v1017
  %vm1035 = vweird.f32 %v1028
  %vm1036 = vmor %vm1034, %vm1035
  %v1037 = vsel %vm1036, %v1028, %v1033
  %v1038 = vmul.f32 %v1004, %v1027
  %v1039 = vmul.f32 %v1005, %v1037
  %v1040 = vperm.slane %v987, 0
  %v1041 = vmul.f32 %v1038, %v1040
  %v1042 = vmul.f32 %v1039, %v1040
  %v1043 = vperm.slane %v988, 0
  %v1044 = vadd.f32 %v1041, %v1043
  %v1045 = vadd.f32 %v1042, %v1043
  %v1046 = vld [vmem:[%s1 + $0x180] sm:$0xff]
  %v1047 = vld [vmem:[%s1 + $0x188] sm:$0xff]
  %v1048 = vld [vmem:[%s1 + $0x190] sm:$0xff]
  %v1049 = vld [vmem:[%s1 + $0x198] sm:$0xff]
  %v1050 = vperm.slane %v989, 0
  %v1052 = vsel %vm115, %v1044, 0
  %v1055 = vsel %vm115, %v1045, 0
  %1057 = vmatpush.msra.mxu0 0.0
  %1058 = vmatpush.msra.mxu0 0.0
  %1059 = vmatpush.msra.mxu0 0.0
  %1060 = vmatpush.msra.mxu0 0.0
  %1061 = vmatpush.msra.mxu0 0.0
  %1062 = vmatpush.msra.mxu0 0.0
  %1063 = vmatpush.msra.mxu0 0.0
  %1064 = vmatpush.msra.mxu0 0.0
  %1065 = vmatpush.msra.mxu0 0.0
  %1066 = vmatpush.msra.mxu0 0.0
  %1067 = vmatpush.msra.mxu0 0.0
  %1068 = vmatpush.msra.mxu0 0.0
  %1069 = vmatpush.msra.mxu0 %v1049
  %1070 = vmatpush.msra.mxu0 %v1048
  %1071 = vmatpush.msra.mxu0 %v1047
  %1072 = vmatpush.msra.mxu0 %v1046
  %1073 = vmatmul.f32.gmra.mxu0 %v1052
  %v1074 = vpop.f32.mrf.mxu0
  %v1075 = vadd.f32 %v1050, %v1074
  %1076 = vmatmul.f32.gmra.mxu0 %v1055
  %v1077 = vpop.f32.mrf.mxu0
  %v1078 = vadd.f32 %v1050, %v1077
  %1079 = vdwg.mxu0
  %v1080 = vld [vmem:[%s1 + $0x1a0] sm:$0xff]
  %v1081 = vld [vmem:[%s1 + $0x1a8] sm:$0xff]
  %v1082 = vld [vmem:[%s1 + $0x1b0] sm:$0xff]
  %v1083 = vld [vmem:[%s1 + $0x1b8] sm:$0xff]
  %v1084 = vperm.slane %v990, 0
  %1085 = vmatpush.msra.mxu0 0.0
  %1086 = vmatpush.msra.mxu0 0.0
  %1087 = vmatpush.msra.mxu0 0.0
  %1088 = vmatpush.msra.mxu0 0.0
  %1089 = vmatpush.msra.mxu0 0.0
  %1090 = vmatpush.msra.mxu0 0.0
  %1091 = vmatpush.msra.mxu0 0.0
  %1092 = vmatpush.msra.mxu0 0.0
  %1093 = vmatpush.msra.mxu0 0.0
  %1094 = vmatpush.msra.mxu0 0.0
  %1095 = vmatpush.msra.mxu0 0.0
  %1096 = vmatpush.msra.mxu0 0.0
  %1097 = vmatpush.msra.mxu0 %v1083
  %1098 = vmatpush.msra.mxu0 %v1082
  %1099 = vmatpush.msra.mxu0 %v1081
  %1100 = vmatpush.msra.mxu0 %v1080
  %1101 = vmatmul.f32.gmra.mxu0 %v1052
  %v1102 = vpop.f32.mrf.mxu0
  %v1103 = vadd.f32 %v1084, %v1102
  %1104 = vmatmul.f32.gmra.mxu0 %v1055
  %v1105 = vpop.f32.mrf.mxu0
  %v1106 = vadd.f32 %v1084, %v1105
  %1107 = vdwg.mxu0
  %v1108 = vld [vmem:[%s1 + $0x1c0] sm:$0xff]
  %v1109 = vld [vmem:[%s1 + $0x1c8] sm:$0xff]
  %v1110 = vld [vmem:[%s1 + $0x1d0] sm:$0xff]
  %v1111 = vld [vmem:[%s1 + $0x1d8] sm:$0xff]
  %v1112 = vperm.slane %v991, 0
  %1113 = vmatpush.msra.mxu0 0.0
  %1114 = vmatpush.msra.mxu0 0.0
  %1115 = vmatpush.msra.mxu0 0.0
  %1116 = vmatpush.msra.mxu0 0.0
  %1117 = vmatpush.msra.mxu0 0.0
  %1118 = vmatpush.msra.mxu0 0.0
  %1119 = vmatpush.msra.mxu0 0.0
  %1120 = vmatpush.msra.mxu0 0.0
  %1121 = vmatpush.msra.mxu0 0.0
  %1122 = vmatpush.msra.mxu0 0.0
  %1123 = vmatpush.msra.mxu0 0.0
  %1124 = vmatpush.msra.mxu0 0.0
  %1125 = vmatpush.msra.mxu0 %v1111
  %1126 = vmatpush.msra.mxu0 %v1110
  %1127 = vmatpush.msra.mxu0 %v1109
  %1128 = vmatpush.msra.mxu0 %v1108
  %1129 = vmatmul.f32.gmra.mxu0 %v1052
  %v1130 = vpop.f32.mrf.mxu0
  %v1131 = vadd.f32 %v1112, %v1130
  %1132 = vmatmul.f32.gmra.mxu0 %v1055
  %v1133 = vpop.f32.mrf.mxu0
  %v1134 = vadd.f32 %v1112, %v1133
  %1135 = vdwg.mxu0
  %v1137 = vsel %vm263, %v1075, 0
  %v1140 = vsel %vm263, %v1103, 0
  %1142 = vmatpush.xpose.msra.mxu0 0.0
  %1143 = vmatpush.xpose.msra.mxu0 0.0
  %1144 = vmatpush.xpose.msra.mxu0 0.0
  %1145 = vmatpush.xpose.msra.mxu0 0.0
  %1146 = vmatpush.xpose.msra.mxu0 0.0
  %1147 = vmatpush.xpose.msra.mxu0 0.0
  %1148 = vmatpush.xpose.msra.mxu0 0.0
  %1149 = vmatpush.xpose.msra.mxu0 0.0
  %1150 = vmatpush.xpose.msra.mxu0 0.0
  %1151 = vmatpush.xpose.msra.mxu0 0.0
  %1152 = vmatpush.xpose.msra.mxu0 0.0
  %1153 = vmatpush.xpose.msra.mxu0 0.0
  %1154 = vmatpush.xpose.msra.mxu0 0.0
  %1155 = vmatpush.xpose.msra.mxu0 0.0
  %1156 = vmatpush.xpose.msra.mxu0 0.0
  %1157 = vmatpush.xpose.msra.mxu0 %v1140
  %1158 = vmatmul.f32.gmra.mxu0 %v1137
  %v1159 = vpop.f32.mrf.mxu0
  %v1160 = vadd.f32 %v105, %v1159
  %1161 = vdwg.mxu0
  %v1163 = vsel %vm263, %v1078, 0
  %v1166 = vsel %vm263, %v1106, 0
  %1168 = vmatpush.xpose.msra.mxu0 0.0
  %1169 = vmatpush.xpose.msra.mxu0 0.0
  %1170 = vmatpush.xpose.msra.mxu0 0.0
  %1171 = vmatpush.xpose.msra.mxu0 0.0
  %1172 = vmatpush.xpose.msra.mxu0 0.0
  %1173 = vmatpush.xpose.msra.mxu0 0.0
  %1174 = vmatpush.xpose.msra.mxu0 0.0
  %1175 = vmatpush.xpose.msra.mxu0 0.0
  %1176 = vmatpush.xpose.msra.mxu0 0.0
  %1177 = vmatpush.xpose.msra.mxu0 0.0
  %1178 = vmatpush.xpose.msra.mxu0 0.0
  %1179 = vmatpush.xpose.msra.mxu0 0.0
  %1180 = vmatpush.xpose.msra.mxu0 0.0
  %1181 = vmatpush.xpose.msra.mxu0 0.0
  %1182 = vmatpush.xpose.msra.mxu0 0.0
  %1183 = vmatpush.xpose.msra.mxu0 %v1166
  %1184 = vmatmul.f32.gmra.mxu0 %v1163
  %v1185 = vpop.f32.mrf.mxu0
  %v1186 = vadd.f32 %v105, %v1185
  %1187 = vdwg.mxu0
  %v1188 = vsel %vm263, %v1160, -inf
  %1189 = vmax.xlane.f32.xlu0 %v1188
  %v1190 = vpop.xlane.xlu0 %1189
  %v1191 = vsel %vm263, %v1186, -inf
  %1192 = vmax.xlane.f32.xlu0 %v1191
  %v1193 = vpop.xlane.xlu0 %1192
  %v1194 = vsub.f32 %v1160, %v1190
  %v1195 = vsub.f32 %v1186, %v1193
  %v1196 = vmul.f32 %v1194, 1.442695
  %v1197 = vpow.pop %v1196
  %v1198 = vmul.f32 %v1195, 1.442695
  %v1199 = vpow.pop %v1198
  %v1200 = vsel %vm263, %v1197, 0.0
  %1201 = vadd.xlane.f32.xlu0 %v1200
  %v1202 = vpop.xlane.xlu0 %1201
  %v1203 = vsel %vm263, %v1199, 0.0
  %1204 = vadd.xlane.f32.xlu0 %v1203
  %v1205 = vpop.xlane.xlu0 %1204
  %v1206 = vrcp.pop %v1202
  %v1207 = vrcp.pop %v1205
  %v1208 = vmul.f32 %v1197, %v1206
  %v1209 = vmul.f32 %v1199, %v1207
  %v1211 = vsel %vm263, %v1208, 0
  %1213 = vmatpush.msra.mxu0 0.0
  %1214 = vmatpush.msra.mxu0 0.0
  %1215 = vmatpush.msra.mxu0 0.0
  %1216 = vmatpush.msra.mxu0 0.0
  %1217 = vmatpush.msra.mxu0 0.0
  %1218 = vmatpush.msra.mxu0 0.0
  %1219 = vmatpush.msra.mxu0 0.0
  %1220 = vmatpush.msra.mxu0 0.0
  %1221 = vmatpush.msra.mxu0 0.0
  %1222 = vmatpush.msra.mxu0 0.0
  %1223 = vmatpush.msra.mxu0 0.0
  %1224 = vmatpush.msra.mxu0 0.0
  %1225 = vmatpush.msra.mxu0 0.0
  %1226 = vmatpush.msra.mxu0 0.0
  %1227 = vmatpush.msra.mxu0 0.0
  %1228 = vmatpush.msra.mxu0 %v1131
  %1229 = vmatmul.f32.gmra.mxu0 %v1211
  %v1230 = vpop.f32.mrf.mxu0
  %v1231 = vadd.f32 0.0, %v1230
  %1232 = vdwg.mxu0
  %v1234 = vsel %vm263, %v1209, 0
  %1236 = vmatpush.msra.mxu0 0.0
  %1237 = vmatpush.msra.mxu0 0.0
  %1238 = vmatpush.msra.mxu0 0.0
  %1239 = vmatpush.msra.mxu0 0.0
  %1240 = vmatpush.msra.mxu0 0.0
  %1241 = vmatpush.msra.mxu0 0.0
  %1242 = vmatpush.msra.mxu0 0.0
  %1243 = vmatpush.msra.mxu0 0.0
  %1244 = vmatpush.msra.mxu0 0.0
  %1245 = vmatpush.msra.mxu0 0.0
  %1246 = vmatpush.msra.mxu0 0.0
  %1247 = vmatpush.msra.mxu0 0.0
  %1248 = vmatpush.msra.mxu0 0.0
  %1249 = vmatpush.msra.mxu0 0.0
  %1250 = vmatpush.msra.mxu0 0.0
  %1251 = vmatpush.msra.mxu0 %v1134
  %1252 = vmatmul.f32.gmra.mxu0 %v1234
  %v1253 = vpop.f32.mrf.mxu0
  %v1254 = vadd.f32 0.0, %v1253
  %1255 = vdwg.mxu0
  %1256 = vrot.lane.b32.xlu0 %v1075, 120
  %v1257 = vpop.permute.xlu0 %1256
  %1258 = vrot.lane.b32.xlu0 %v1103, 120
  %v1259 = vpop.permute.xlu0 %1258
  %v1260 = vsel %vm263, %v1257, 0
  %v1262 = vsel %vm263, %v1259, 0
  %1264 = vmatpush.xpose.msra.mxu0 0.0
  %1265 = vmatpush.xpose.msra.mxu0 0.0
  %1266 = vmatpush.xpose.msra.mxu0 0.0
  %1267 = vmatpush.xpose.msra.mxu0 0.0
  %1268 = vmatpush.xpose.msra.mxu0 0.0
  %1269 = vmatpush.xpose.msra.mxu0 0.0
  %1270 = vmatpush.xpose.msra.mxu0 0.0
  %1271 = vmatpush.xpose.msra.mxu0 0.0
  %1272 = vmatpush.xpose.msra.mxu0 0.0
  %1273 = vmatpush.xpose.msra.mxu0 0.0
  %1274 = vmatpush.xpose.msra.mxu0 0.0
  %1275 = vmatpush.xpose.msra.mxu0 0.0
  %1276 = vmatpush.xpose.msra.mxu0 0.0
  %1277 = vmatpush.xpose.msra.mxu0 0.0
  %1278 = vmatpush.xpose.msra.mxu0 0.0
  %1279 = vmatpush.xpose.msra.mxu0 %v1262
  %1280 = vmatmul.f32.gmra.mxu0 %v1260
  %v1281 = vpop.f32.mrf.mxu0
  %v1282 = vadd.f32 %v105, %v1281
  %1283 = vdwg.mxu0
  %1284 = vrot.lane.b32.xlu0 %v1078, 120
  %v1285 = vpop.permute.xlu0 %1284
  %1286 = vrot.lane.b32.xlu0 %v1106, 120
  %v1287 = vpop.permute.xlu0 %1286
  %v1288 = vsel %vm263, %v1285, 0
  %v1290 = vsel %vm263, %v1287, 0
  %1292 = vmatpush.xpose.msra.mxu0 0.0
  %1293 = vmatpush.xpose.msra.mxu0 0.0
  %1294 = vmatpush.xpose.msra.mxu0 0.0
  %1295 = vmatpush.xpose.msra.mxu0 0.0
  %1296 = vmatpush.xpose.msra.mxu0 0.0
  %1297 = vmatpush.xpose.msra.mxu0 0.0
  %1298 = vmatpush.xpose.msra.mxu0 0.0
  %1299 = vmatpush.xpose.msra.mxu0 0.0
  %1300 = vmatpush.xpose.msra.mxu0 0.0
  %1301 = vmatpush.xpose.msra.mxu0 0.0
  %1302 = vmatpush.xpose.msra.mxu0 0.0
  %1303 = vmatpush.xpose.msra.mxu0 0.0
  %1304 = vmatpush.xpose.msra.mxu0 0.0
  %1305 = vmatpush.xpose.msra.mxu0 0.0
  %1306 = vmatpush.xpose.msra.mxu0 0.0
  %1307 = vmatpush.xpose.msra.mxu0 %v1290
  %1308 = vmatmul.f32.gmra.mxu0 %v1288
  %v1309 = vpop.f32.mrf.mxu0
  %v1310 = vadd.f32 %v105, %v1309
  %1311 = vdwg.mxu0
  %v1312 = vsel %vm263, %v1282, -inf
  %1313 = vmax.xlane.f32.xlu0 %v1312
  %v1314 = vpop.xlane.xlu0 %1313
  %v1315 = vsel %vm263, %v1310, -inf
  %1316 = vmax.xlane.f32.xlu0 %v1315
  %v1317 = vpop.xlane.xlu0 %1316
  %v1318 = vsub.f32 %v1282, %v1314
  %v1319 = vsub.f32 %v1310, %v1317
  %v1320 = vmul.f32 %v1318, 1.442695
  %v1321 = vpow.pop %v1320
  %v1322 = vmul.f32 %v1319, 1.442695
  %v1323 = vpow.pop %v1322
  %v1324 = vsel %vm263, %v1321, 0.0
  %1325 = vadd.xlane.f32.xlu0 %v1324
  %v1326 = vpop.xlane.xlu0 %1325
  %v1327 = vsel %vm263, %v1323, 0.0
  %1328 = vadd.xlane.f32.xlu0 %v1327
  %v1329 = vpop.xlane.xlu0 %1328
  %v1330 = vrcp.pop %v1326
  %v1331 = vrcp.pop %v1329
  %v1332 = vmul.f32 %v1321, %v1330
  %v1333 = vmul.f32 %v1323, %v1331
  %1335 = vrot.lane.b32.xlu0 %v1131, 120
  %v1336 = vpop.permute.xlu0 %1335
  %v1339 = vsel %vm263, %v1332, 0
  %1341 = vmatpush.msra.mxu0 0.0
  %1342 = vmatpush.msra.mxu0 0.0
  %1343 = vmatpush.msra.mxu0 0.0
  %1344 = vmatpush.msra.mxu0 0.0
  %1345 = vmatpush.msra.mxu0 0.0
  %1346 = vmatpush.msra.mxu0 0.0
  %1347 = vmatpush.msra.mxu0 0.0
  %1348 = vmatpush.msra.mxu0 0.0
  %1349 = vmatpush.msra.mxu0 0.0
  %1350 = vmatpush.msra.mxu0 0.0
  %1351 = vmatpush.msra.mxu0 0.0
  %1352 = vmatpush.msra.mxu0 0.0
  %1353 = vmatpush.msra.mxu0 0.0
  %1354 = vmatpush.msra.mxu0 0.0
  %1355 = vmatpush.msra.mxu0 0.0
  %1356 = vmatpush.msra.mxu0 %v1336
  %1357 = vmatmul.f32.gmra.mxu0 %v1339
  %v1358 = vpop.f32.mrf.mxu0
  %v1359 = vadd.f32 0.0, %v1358
  %1360 = vdwg.mxu0
  %1362 = vrot.lane.b32.xlu0 %v1134, 120
  %v1363 = vpop.permute.xlu0 %1362
  %v1366 = vsel %vm263, %v1333, 0
  %1368 = vmatpush.msra.mxu0 0.0
  %1369 = vmatpush.msra.mxu0 0.0
  %1370 = vmatpush.msra.mxu0 0.0
  %1371 = vmatpush.msra.mxu0 0.0
  %1372 = vmatpush.msra.mxu0 0.0
  %1373 = vmatpush.msra.mxu0 0.0
  %1374 = vmatpush.msra.mxu0 0.0
  %1375 = vmatpush.msra.mxu0 0.0
  %1376 = vmatpush.msra.mxu0 0.0
  %1377 = vmatpush.msra.mxu0 0.0
  %1378 = vmatpush.msra.mxu0 0.0
  %1379 = vmatpush.msra.mxu0 0.0
  %1380 = vmatpush.msra.mxu0 0.0
  %1381 = vmatpush.msra.mxu0 0.0
  %1382 = vmatpush.msra.mxu0 0.0
  %1383 = vmatpush.msra.mxu0 %v1363
  %1384 = vmatmul.f32.gmra.mxu0 %v1366
  %v1385 = vpop.f32.mrf.mxu0
  %v1386 = vadd.f32 0.0, %v1385
  %1387 = vdwg.mxu0
  %1388 = vrot.lane.b32.xlu0 %v1075, 112
  %v1389 = vpop.permute.xlu0 %1388
  %1390 = vrot.lane.b32.xlu0 %v1103, 112
  %v1391 = vpop.permute.xlu0 %1390
  %v1392 = vsel %vm263, %v1389, 0
  %v1394 = vsel %vm263, %v1391, 0
  %1396 = vmatpush.xpose.msra.mxu0 0.0
  %1397 = vmatpush.xpose.msra.mxu0 0.0
  %1398 = vmatpush.xpose.msra.mxu0 0.0
  %1399 = vmatpush.xpose.msra.mxu0 0.0
  %1400 = vmatpush.xpose.msra.mxu0 0.0
  %1401 = vmatpush.xpose.msra.mxu0 0.0
  %1402 = vmatpush.xpose.msra.mxu0 0.0
  %1403 = vmatpush.xpose.msra.mxu0 0.0
  %1404 = vmatpush.xpose.msra.mxu0 0.0
  %1405 = vmatpush.xpose.msra.mxu0 0.0
  %1406 = vmatpush.xpose.msra.mxu0 0.0
  %1407 = vmatpush.xpose.msra.mxu0 0.0
  %1408 = vmatpush.xpose.msra.mxu0 0.0
  %1409 = vmatpush.xpose.msra.mxu0 0.0
  %1410 = vmatpush.xpose.msra.mxu0 0.0
  %1411 = vmatpush.xpose.msra.mxu0 %v1394
  %1412 = vmatmul.f32.gmra.mxu0 %v1392
  %v1413 = vpop.f32.mrf.mxu0
  %v1414 = vadd.f32 %v105, %v1413
  %1415 = vdwg.mxu0
  %1416 = vrot.lane.b32.xlu0 %v1078, 112
  %v1417 = vpop.permute.xlu0 %1416
  %1418 = vrot.lane.b32.xlu0 %v1106, 112
  %v1419 = vpop.permute.xlu0 %1418
  %v1420 = vsel %vm263, %v1417, 0
  %v1422 = vsel %vm263, %v1419, 0
  %1424 = vmatpush.xpose.msra.mxu0 0.0
  %1425 = vmatpush.xpose.msra.mxu0 0.0
  %1426 = vmatpush.xpose.msra.mxu0 0.0
  %1427 = vmatpush.xpose.msra.mxu0 0.0
  %1428 = vmatpush.xpose.msra.mxu0 0.0
  %1429 = vmatpush.xpose.msra.mxu0 0.0
  %1430 = vmatpush.xpose.msra.mxu0 0.0
  %1431 = vmatpush.xpose.msra.mxu0 0.0
  %1432 = vmatpush.xpose.msra.mxu0 0.0
  %1433 = vmatpush.xpose.msra.mxu0 0.0
  %1434 = vmatpush.xpose.msra.mxu0 0.0
  %1435 = vmatpush.xpose.msra.mxu0 0.0
  %1436 = vmatpush.xpose.msra.mxu0 0.0
  %1437 = vmatpush.xpose.msra.mxu0 0.0
  %1438 = vmatpush.xpose.msra.mxu0 0.0
  %1439 = vmatpush.xpose.msra.mxu0 %v1422
  %1440 = vmatmul.f32.gmra.mxu0 %v1420
  %v1441 = vpop.f32.mrf.mxu0
  %v1442 = vadd.f32 %v105, %v1441
  %1443 = vdwg.mxu0
  %v1444 = vsel %vm263, %v1414, -inf
  %1445 = vmax.xlane.f32.xlu0 %v1444
  %v1446 = vpop.xlane.xlu0 %1445
  %v1447 = vsel %vm263, %v1442, -inf
  %1448 = vmax.xlane.f32.xlu0 %v1447
  %v1449 = vpop.xlane.xlu0 %1448
  %v1450 = vsub.f32 %v1414, %v1446
  %v1451 = vsub.f32 %v1442, %v1449
  %v1452 = vmul.f32 %v1450, 1.442695
  %v1453 = vpow.pop %v1452
  %v1454 = vmul.f32 %v1451, 1.442695
  %v1455 = vpow.pop %v1454
  %v1456 = vsel %vm263, %v1453, 0.0
  %1457 = vadd.xlane.f32.xlu0 %v1456
  %v1458 = vpop.xlane.xlu0 %1457
  %v1459 = vsel %vm263, %v1455, 0.0
  %1460 = vadd.xlane.f32.xlu0 %v1459
  %v1461 = vpop.xlane.xlu0 %1460
  %v1462 = vrcp.pop %v1458
  %v1463 = vrcp.pop %v1461
  %v1464 = vmul.f32 %v1453, %v1462
  %v1465 = vmul.f32 %v1455, %v1463
  %1466 = vrot.lane.b32.xlu0 %v1131, 112
  %v1467 = vpop.permute.xlu0 %1466
  %v1470 = vsel %vm263, %v1464, 0
  %1472 = vmatpush.msra.mxu0 0.0
  %1473 = vmatpush.msra.mxu0 0.0
  %1474 = vmatpush.msra.mxu0 0.0
  %1475 = vmatpush.msra.mxu0 0.0
  %1476 = vmatpush.msra.mxu0 0.0
  %1477 = vmatpush.msra.mxu0 0.0
  %1478 = vmatpush.msra.mxu0 0.0
  %1479 = vmatpush.msra.mxu0 0.0
  %1480 = vmatpush.msra.mxu0 0.0
  %1481 = vmatpush.msra.mxu0 0.0
  %1482 = vmatpush.msra.mxu0 0.0
  %1483 = vmatpush.msra.mxu0 0.0
  %1484 = vmatpush.msra.mxu0 0.0
  %1485 = vmatpush.msra.mxu0 0.0
  %1486 = vmatpush.msra.mxu0 0.0
  %1487 = vmatpush.msra.mxu0 %v1467
  %1488 = vmatmul.f32.gmra.mxu0 %v1470
  %v1489 = vpop.f32.mrf.mxu0
  %v1490 = vadd.f32 0.0, %v1489
  %1491 = vdwg.mxu0
  %1492 = vrot.lane.b32.xlu0 %v1134, 112
  %v1493 = vpop.permute.xlu0 %1492
  %v1496 = vsel %vm263, %v1465, 0
  %1498 = vmatpush.msra.mxu0 0.0
  %1499 = vmatpush.msra.mxu0 0.0
  %1500 = vmatpush.msra.mxu0 0.0
  %1501 = vmatpush.msra.mxu0 0.0
  %1502 = vmatpush.msra.mxu0 0.0
  %1503 = vmatpush.msra.mxu0 0.0
  %1504 = vmatpush.msra.mxu0 0.0
  %1505 = vmatpush.msra.mxu0 0.0
  %1506 = vmatpush.msra.mxu0 0.0
  %1507 = vmatpush.msra.mxu0 0.0
  %1508 = vmatpush.msra.mxu0 0.0
  %1509 = vmatpush.msra.mxu0 0.0
  %1510 = vmatpush.msra.mxu0 0.0
  %1511 = vmatpush.msra.mxu0 0.0
  %1512 = vmatpush.msra.mxu0 0.0
  %1513 = vmatpush.msra.mxu0 %v1493
  %1514 = vmatmul.f32.gmra.mxu0 %v1496
  %v1515 = vpop.f32.mrf.mxu0
  %v1516 = vadd.f32 0.0, %v1515
  %1517 = vdwg.mxu0
  %1518 = vrot.lane.b32.xlu0 %v1075, 104
  %v1519 = vpop.permute.xlu0 %1518
  %1520 = vrot.lane.b32.xlu0 %v1103, 104
  %v1521 = vpop.permute.xlu0 %1520
  %v1522 = vsel %vm263, %v1519, 0
  %v1524 = vsel %vm263, %v1521, 0
  %1526 = vmatpush.xpose.msra.mxu0 0.0
  %1527 = vmatpush.xpose.msra.mxu0 0.0
  %1528 = vmatpush.xpose.msra.mxu0 0.0
  %1529 = vmatpush.xpose.msra.mxu0 0.0
  %1530 = vmatpush.xpose.msra.mxu0 0.0
  %1531 = vmatpush.xpose.msra.mxu0 0.0
  %1532 = vmatpush.xpose.msra.mxu0 0.0
  %1533 = vmatpush.xpose.msra.mxu0 0.0
  %1534 = vmatpush.xpose.msra.mxu0 0.0
  %1535 = vmatpush.xpose.msra.mxu0 0.0
  %1536 = vmatpush.xpose.msra.mxu0 0.0
  %1537 = vmatpush.xpose.msra.mxu0 0.0
  %1538 = vmatpush.xpose.msra.mxu0 0.0
  %1539 = vmatpush.xpose.msra.mxu0 0.0
  %1540 = vmatpush.xpose.msra.mxu0 0.0
  %1541 = vmatpush.xpose.msra.mxu0 %v1524
  %1542 = vmatmul.f32.gmra.mxu0 %v1522
  %v1543 = vpop.f32.mrf.mxu0
  %v1544 = vadd.f32 %v105, %v1543
  %1545 = vdwg.mxu0
  %1546 = vrot.lane.b32.xlu0 %v1078, 104
  %v1547 = vpop.permute.xlu0 %1546
  %1548 = vrot.lane.b32.xlu0 %v1106, 104
  %v1549 = vpop.permute.xlu0 %1548
  %v1550 = vsel %vm263, %v1547, 0
  %v1552 = vsel %vm263, %v1549, 0
  %1554 = vmatpush.xpose.msra.mxu0 0.0
  %1555 = vmatpush.xpose.msra.mxu0 0.0
  %1556 = vmatpush.xpose.msra.mxu0 0.0
  %1557 = vmatpush.xpose.msra.mxu0 0.0
  %1558 = vmatpush.xpose.msra.mxu0 0.0
  %1559 = vmatpush.xpose.msra.mxu0 0.0
  %1560 = vmatpush.xpose.msra.mxu0 0.0
  %1561 = vmatpush.xpose.msra.mxu0 0.0
  %1562 = vmatpush.xpose.msra.mxu0 0.0
  %1563 = vmatpush.xpose.msra.mxu0 0.0
  %1564 = vmatpush.xpose.msra.mxu0 0.0
  %1565 = vmatpush.xpose.msra.mxu0 0.0
  %1566 = vmatpush.xpose.msra.mxu0 0.0
  %1567 = vmatpush.xpose.msra.mxu0 0.0
  %1568 = vmatpush.xpose.msra.mxu0 0.0
  %1569 = vmatpush.xpose.msra.mxu0 %v1552
  %1570 = vmatmul.f32.gmra.mxu0 %v1550
  %v1571 = vpop.f32.mrf.mxu0
  %v1572 = vadd.f32 %v105, %v1571
  %1573 = vdwg.mxu0
  %v1574 = vsel %vm263, %v1544, -inf
  %1575 = vmax.xlane.f32.xlu0 %v1574
  %v1576 = vpop.xlane.xlu0 %1575
  %v1577 = vsel %vm263, %v1572, -inf
  %1578 = vmax.xlane.f32.xlu0 %v1577
  %v1579 = vpop.xlane.xlu0 %1578
  %v1580 = vsub.f32 %v1544, %v1576
  %v1581 = vsub.f32 %v1572, %v1579
  %v1582 = vmul.f32 %v1580, 1.442695
  %v1583 = vpow.pop %v1582
  %v1584 = vmul.f32 %v1581, 1.442695
  %v1585 = vpow.pop %v1584
  %v1586 = vsel %vm263, %v1583, 0.0
  %1587 = vadd.xlane.f32.xlu0 %v1586
  %v1588 = vpop.xlane.xlu0 %1587
  %v1589 = vsel %vm263, %v1585, 0.0
  %1590 = vadd.xlane.f32.xlu0 %v1589
  %v1591 = vpop.xlane.xlu0 %1590
  %v1592 = vrcp.pop %v1588
  %v1593 = vrcp.pop %v1591
  %v1594 = vmul.f32 %v1583, %v1592
  %v1595 = vmul.f32 %v1585, %v1593
  %1596 = vrot.lane.b32.xlu0 %v1131, 104
  %v1597 = vpop.permute.xlu0 %1596
  %v1600 = vsel %vm263, %v1594, 0
  %1602 = vmatpush.msra.mxu0 0.0
  %1603 = vmatpush.msra.mxu0 0.0
  %1604 = vmatpush.msra.mxu0 0.0
  %1605 = vmatpush.msra.mxu0 0.0
  %1606 = vmatpush.msra.mxu0 0.0
  %1607 = vmatpush.msra.mxu0 0.0
  %1608 = vmatpush.msra.mxu0 0.0
  %1609 = vmatpush.msra.mxu0 0.0
  %1610 = vmatpush.msra.mxu0 0.0
  %1611 = vmatpush.msra.mxu0 0.0
  %1612 = vmatpush.msra.mxu0 0.0
  %1613 = vmatpush.msra.mxu0 0.0
  %1614 = vmatpush.msra.mxu0 0.0
  %1615 = vmatpush.msra.mxu0 0.0
  %1616 = vmatpush.msra.mxu0 0.0
  %1617 = vmatpush.msra.mxu0 %v1597
  %1618 = vmatmul.f32.gmra.mxu0 %v1600
  %v1619 = vpop.f32.mrf.mxu0
  %v1620 = vadd.f32 0.0, %v1619
  %1621 = vdwg.mxu0
  %1622 = vrot.lane.b32.xlu0 %v1134, 104
  %v1623 = vpop.permute.xlu0 %1622
  %v1626 = vsel %vm263, %v1595, 0
  %1628 = vmatpush.msra.mxu0 0.0
  %1629 = vmatpush.msra.mxu0 0.0
  %1630 = vmatpush.msra.mxu0 0.0
  %1631 = vmatpush.msra.mxu0 0.0
  %1632 = vmatpush.msra.mxu0 0.0
  %1633 = vmatpush.msra.mxu0 0.0
  %1634 = vmatpush.msra.mxu0 0.0
  %1635 = vmatpush.msra.mxu0 0.0
  %1636 = vmatpush.msra.mxu0 0.0
  %1637 = vmatpush.msra.mxu0 0.0
  %1638 = vmatpush.msra.mxu0 0.0
  %1639 = vmatpush.msra.mxu0 0.0
  %1640 = vmatpush.msra.mxu0 0.0
  %1641 = vmatpush.msra.mxu0 0.0
  %1642 = vmatpush.msra.mxu0 0.0
  %1643 = vmatpush.msra.mxu0 %v1623
  %1644 = vmatmul.f32.gmra.mxu0 %v1626
  %v1645 = vpop.f32.mrf.mxu0
  %v1646 = vadd.f32 0.0, %v1645
  %1647 = vdwg.mxu0
  %1650 = vrot.lane.b32.xlu0 %v1359, 8
  %v1651 = vpop.permute.xlu0 %1650
  %1652 = vrot.lane.b32.xlu0 %v1386, 8
  %v1653 = vpop.permute.xlu0 %1652
  %1658 = vrot.lane.b32.xlu0 %v1490, 16
  %v1659 = vpop.permute.xlu0 %1658
  %1660 = vrot.lane.b32.xlu0 %v1516, 16
  %v1661 = vpop.permute.xlu0 %1660
  %1666 = vrot.lane.b32.xlu0 %v1620, 24
  %v1667 = vpop.permute.xlu0 %1666
  %1668 = vrot.lane.b32.xlu0 %v1646, 24
  %v1669 = vpop.permute.xlu0 %1668
  %v1672 = vsel %vm263, %v1231, %v1651
  %v1673 = vsel %vm263, %v1254, %v1653
  %v1674 = vsel %vm802, %v1672, %v1659
  %v1675 = vsel %vm802, %v1673, %v1661
  %v1676 = vsel %vm805, %v1674, %v1667
  %v1677 = vsel %vm805, %v1675, %v1669
  %v1678 = vld [vmem:[%s1 + $0x1e0] sm:$0xff]
  %v1679 = vld [vmem:[%s1 + $0x1e8] sm:$0xff]
  %v1680 = vld [vmem:[%s1 + $0x1f0] sm:$0xff]
  %v1681 = vld [vmem:[%s1 + $0x1f8] sm:$0xff]
  %v1682 = vperm.slane %v992, 0
  %v1684 = vsel %vm115, %v1676, 0
  %v1687 = vsel %vm115, %v1677, 0
  %1689 = vmatpush.msra.mxu0 0.0
  %1690 = vmatpush.msra.mxu0 0.0
  %1691 = vmatpush.msra.mxu0 0.0
  %1692 = vmatpush.msra.mxu0 0.0
  %1693 = vmatpush.msra.mxu0 0.0
  %1694 = vmatpush.msra.mxu0 0.0
  %1695 = vmatpush.msra.mxu0 0.0
  %1696 = vmatpush.msra.mxu0 0.0
  %1697 = vmatpush.msra.mxu0 0.0
  %1698 = vmatpush.msra.mxu0 0.0
  %1699 = vmatpush.msra.mxu0 0.0
  %1700 = vmatpush.msra.mxu0 0.0
  %1701 = vmatpush.msra.mxu0 %v1681
  %1702 = vmatpush.msra.mxu0 %v1680
  %1703 = vmatpush.msra.mxu0 %v1679
  %1704 = vmatpush.msra.mxu0 %v1678
  %1705 = vmatmul.f32.gmra.mxu0 %v1684
  %v1706 = vpop.f32.mrf.mxu0
  %v1707 = vadd.f32 %v1682, %v1706
  %1708 = vmatmul.f32.gmra.mxu0 %v1687
  %v1709 = vpop.f32.mrf.mxu0
  %v1710 = vadd.f32 %v1682, %v1709
  %1711 = vdwg.mxu0
  %v1712 = vadd.f32 %v985, %v1707
  %v1713 = vadd.f32 %v986, %v1710
  %v1714 = vsel %vm115, %v1712, 0.0
  %1715 = vadd.xlane.f32.xlu0 %v1714
  %v1716 = vpop.xlane.xlu0 %1715
  %v1717 = vsel %vm115, %v1713, 0.0
  %1718 = vadd.xlane.f32.xlu0 %v1717
  %v1719 = vpop.xlane.xlu0 %1718
  %v1720 = vmul.f32 %v1716, %v128
  %v1721 = vmul.f32 %v1719, %v128
  %v1722 = vsub.f32 %v1712, %v1720
  %v1723 = vsub.f32 %v1713, %v1721
  %v1724 = vmul.f32 %v1722, %v1722
  %v1725 = vmul.f32 %v1723, %v1723
  %v1726 = vsel %vm115, %v1724, 0.0
  %1727 = vadd.xlane.f32.xlu0 %v1726
  %v1728 = vpop.xlane.xlu0 %1727
  %v1729 = vsel %vm115, %v1725, 0.0
  %1730 = vadd.xlane.f32.xlu0 %v1729
  %v1731 = vpop.xlane.xlu0 %1730
  %v1732 = vmul.f32 %v1728, %v128
  %v1733 = vmul.f32 %v1731, %v128
  %v1734 = vadd.f32 %v1732, 1e-12
  %v1735 = vadd.f32 %v1733, 1e-12
  %v1736 = vrsqrt.pop %v1734
  %v1737 = vmul.f32 %v1736, %v1734
  %v1738 = vmul.f32 %v1737, %v1736
  %v1739 = vmul.f32 0.5, %v1738
  %v1740 = vsub.f32 1.5, %v1739
  %v1741 = vmul.f32 %v1736, %v1740
  %vm1742 = vweird.f32 %v1734
  %vm1743 = vweird.f32 %v1736
  %vm1744 = vmor %vm1742, %vm1743
  %v1745 = vsel %vm1744, %v1736, %v1741
  %v1746 = vrsqrt.pop %v1735
  %v1747 = vmul.f32 %v1746, %v1735
  %v1748 = vmul.f32 %v1747, %v1746
  %v1749 = vmul.f32 0.5, %v1748
  %v1750 = vsub.f32 1.5, %v1749
  %v1751 = vmul.f32 %v1746, %v1750
  %vm1752 = vweird.f32 %v1735
  %vm1753 = vweird.f32 %v1746
  %vm1754 = vmor %vm1752, %vm1753
  %v1755 = vsel %vm1754, %v1746, %v1751
  %v1756 = vmul.f32 %v1722, %v1745
  %v1757 = vmul.f32 %v1723, %v1755
  %v1758 = vperm.slane %v993, 0
  %v1759 = vmul.f32 %v1756, %v1758
  %v1760 = vmul.f32 %v1757, %v1758
  %v1761 = vperm.slane %v994, 0
  %v1762 = vadd.f32 %v1759, %v1761
  %v1763 = vadd.f32 %v1760, %v1761
  %v1764 = vld [vmem:[%s2 + $0x20] sm:$0xff]
  %v1765 = vld [vmem:[%s2 + $0x28] sm:$0xff]
  %v1766 = vld [vmem:[%s2 + $0x30] sm:$0xff]
  %v1767 = vld [vmem:[%s2 + $0x38] sm:$0xff]
  %v1768 = vld [vmem:[%s2 + $0x41] sm:$0x1]
  %v1769 = vperm.slane %v1768, 0
  %v1771 = vsel %vm115, %v1762, 0
  %v1774 = vsel %vm115, %v1763, 0
  %1776 = vmatpush.msra.mxu0 0.0
  %1777 = vmatpush.msra.mxu0 0.0
  %1778 = vmatpush.msra.mxu0 0.0
  %1779 = vmatpush.msra.mxu0 0.0
  %1780 = vmatpush.msra.mxu0 0.0
  %1781 = vmatpush.msra.mxu0 0.0
  %1782 = vmatpush.msra.mxu0 0.0
  %1783 = vmatpush.msra.mxu0 0.0
  %1784 = vmatpush.msra.mxu0 0.0
  %1785 = vmatpush.msra.mxu0 0.0
  %1786 = vmatpush.msra.mxu0 0.0
  %1787 = vmatpush.msra.mxu0 0.0
  %1788 = vmatpush.msra.mxu0 %v1767
  %1789 = vmatpush.msra.mxu0 %v1766
  %1790 = vmatpush.msra.mxu0 %v1765
  %1791 = vmatpush.msra.mxu0 %v1764
  %1792 = vmatmul.f32.gmra.mxu0 %v1771
  %v1793 = vpop.f32.mrf.mxu0
  %v1794 = vadd.f32 %v1769, %v1793
  %1795 = vmatmul.f32.gmra.mxu0 %v1774
  %v1796 = vpop.f32.mrf.mxu0
  %v1797 = vadd.f32 %v1769, %v1796
  %1798 = vdwg.mxu0
  %v1799 = vmul.f32 %v1794, %v1794
  %v1800 = vmul.f32 %v1797, %v1797
  %v1801 = vmul.f32 %v1794, %v1799
  %v1802 = vmul.f32 %v1797, %v1800
  %v1803 = vmul.f32 %v1801, 0.044715
  %v1804 = vmul.f32 %v1802, 0.044715
  %v1805 = vadd.f32 %v1794, %v1803
  %v1806 = vadd.f32 %v1797, %v1804
  %v1807 = vmul.f32 %v1805, 0.7978846
  %v1808 = vmul.f32 %v1806, 0.7978846
  %v1809 = vtanh.pop %v1807
  %v1810 = vtanh.pop %v1808
  %v1811 = vadd.f32 %v1809, 1.0
  %v1812 = vadd.f32 %v1810, 1.0
  %v1813 = vmul.f32 %v1811, 0.5
  %v1814 = vmul.f32 %v1812, 0.5
  %v1815 = vmul.f32 %v1794, %v1813
  %v1816 = vmul.f32 %v1797, %v1814
  %v1817 = vld [vmem:[%s1 + $0x200] sm:$0xff]
  %v1818 = vld [vmem:[%s1 + $0x208] sm:$0xff]
  %v1819 = vld [vmem:[%s1 + $0x210] sm:$0xff]
  %v1820 = vld [vmem:[%s1 + $0x218] sm:$0xff]
  %v1821 = vld [vmem:[%s1 + $0x220] sm:$0xff]
  %v1822 = vld [vmem:[%s1 + $0x228] sm:$0xff]
  %v1823 = vld [vmem:[%s1 + $0x230] sm:$0xff]
  %v1824 = vld [vmem:[%s1 + $0x238] sm:$0xff]
  %v1825 = vperm.slane %v995, 0
  %v1827 = vsel %vm49, %v1815, 0
  %v1830 = vsel %vm49, %v1816, 0
  %1832 = vmatpush.msra.mxu0 0.0
  %1833 = vmatpush.msra.mxu0 0.0
  %1834 = vmatpush.msra.mxu0 0.0
  %1835 = vmatpush.msra.mxu0 0.0
  %1836 = vmatpush.msra.mxu0 0.0
  %1837 = vmatpush.msra.mxu0 0.0
  %1838 = vmatpush.msra.mxu0 0.0
  %1839 = vmatpush.msra.mxu0 0.0
  %1840 = vmatpush.msra.mxu0 %v1824
  %1841 = vmatpush.msra.mxu0 %v1823
  %1842 = vmatpush.msra.mxu0 %v1822
  %1843 = vmatpush.msra.mxu0 %v1821
  %1844 = vmatpush.msra.mxu0 %v1820
  %1845 = vmatpush.msra.mxu0 %v1819
  %1846 = vmatpush.msra.mxu0 %v1818
  %1847 = vmatpush.msra.mxu0 %v1817
  %1848 = vmatmul.f32.gmra.mxu0 %v1827
  %v1849 = vpop.f32.mrf.mxu0
  %v1850 = vadd.f32 %v1825, %v1849
  %1851 = vmatmul.f32.gmra.mxu0 %v1830
  %v1852 = vpop.f32.mrf.mxu0
  %v1853 = vadd.f32 %v1825, %v1852
  %1854 = vdwg.mxu0
  %v1855 = vadd.f32 %v1712, %v1850
  %v1856 = vadd.f32 %v1713, %v1853
  %v1858 = vrot.slane %v1856, 7
  %vm1860 = vcmask 1040384
  %v1861 = vsel %vm1860, %v1855, %v1858
  %v1862 = vld [vmem:[%s3 + $0x1a] sm:$0x1]
  %v1863 = vld [vmem:[%s3 + $0x1b] sm:$0x1]
  %vm1864 = vcmask 254976
  %v1865 = vsel %vm1864, %v1861, 0.0
  %1866 = vadd.xlane.f32.xlu0 %v1865
  %v1867 = vpop.xlane.xlu0 %1866
  %v1868 = vmul.f32 %v1867, %v128
  %v1869 = vsub.f32 %v1861, %v1868
  %v1870 = vmul.f32 %v1869, %v1869
  %v1871 = vsel %vm1864, %v1870, 0.0
  %1872 = vadd.xlane.f32.xlu0 %v1871
  %v1873 = vpop.xlane.xlu0 %1872
  %v1874 = vmul.f32 %v1873, %v128
  %v1875 = vadd.f32 %v1874, 1e-12
  %v1876 = vrsqrt.pop %v1875
  %v1877 = vmul.f32 %v1876, %v1875
  %v1878 = vmul.f32 %v1877, %v1876
  %v1879 = vmul.f32 0.5, %v1878
  %v1880 = vsub.f32 1.5, %v1879
  %v1881 = vmul.f32 %v1876, %v1880
  %vm1882 = vweird.f32 %v1875
  %vm1883 = vweird.f32 %v1876
  %vm1884 = vmor %vm1882, %vm1883
  %v1885 = vsel %vm1884, %v1876, %v1881
  %v1886 = vmul.f32 %v1869, %v1885
  %v1887 = vperm.slane %v1862, 0
  %v1888 = vmul.f32 %v1886, %v1887
  %v1889 = vperm.slane %v1863, 0
  %v1890 = vadd.f32 %v1888, %v1889
  %v1891 = vld [vmem:[%s4] sm:$0xff]
  %v1892 = vld [vmem:[%s4 + $0x8] sm:$0xff]
  %v1893 = vld [vmem:[%s4 + $0x10] sm:$0xff]
  %v1894 = vld [vmem:[%s4 + $0x18] sm:$0xff]
  %v1895 = vld [vmem:[%s4 + $0x20] sm:$0x1]
  %v1896 = vperm.slane %v1895, 0
  %v1898 = vsel %vm115, %v1890, 0
  %1900 = vmatpush.msra.mxu0 0.0
  %1901 = vmatpush.msra.mxu0 0.0
  %1902 = vmatpush.msra.mxu0 0.0
  %1903 = vmatpush.msra.mxu0 0.0
  %1904 = vmatpush.msra.mxu0 0.0
  %1905 = vmatpush.msra.mxu0 0.0
  %1906 = vmatpush.msra.mxu0 0.0
  %1907 = vmatpush.msra.mxu0 0.0
  %1908 = vmatpush.msra.mxu0 0.0
  %1909 = vmatpush.msra.mxu0 0.0
  %1910 = vmatpush.msra.mxu0 0.0
  %1911 = vmatpush.msra.mxu0 0.0
  %1912 = vmatpush.msra.mxu0 %v1894
  %1913 = vmatpush.msra.mxu0 %v1893
  %1914 = vmatpush.msra.mxu0 %v1892
  %1915 = vmatpush.msra.mxu0 %v1891
  %1916 = vmatmul.f32.gmra.mxu0 %v1898
  %v1917 = vpop.f32.mrf.mxu0
  %v1918 = vadd.f32 %v1896, %v1917
  %1919 = vdwg.mxu0
  %1920 = vst [vmem:[%s5] sm:$0x3] %v1918
  // Predicated region
  $region22: #{vit_object_detection.1} parent=0 // pred_check
    _
  $region23: #{vit_object_detection.1} parent=0 // pred_check_branch
    %1922 = sbr.rel (0) target = $region25
  $region24: #{vit_object_detection.1} parent=0 // pred_region
    _
  $region25: #{vit_object_detection.1} parent=0 // pred_fallthru
    _
  // Predicated region
  $region26: #{vit_object_detection.1} parent=0 // pred_check
    _
  $region27: #{vit_object_detection.1} parent=0 // pred_check_branch
    %1924 = sbr.rel (0) target = $region29
  $region28: #{vit_object_detection.1} parent=0 // pred_region
    _
  $region29: #{vit_object_detection.1} parent=0 // pred_fallthru
    _

</llo_original>
